<compile_context>
chip_gen: v5e
topology: v5e:2x2
jax: 0.10.0
libtpu: 0.0.40
codegen_flags: <defaults>
</compile_context>

<pallas_src>
import functools
import math

import jax
import jax.numpy as jnp
from jax.experimental import pallas as pl
from jax.experimental.pallas import tpu as pltpu

NEG_SLOPE = 0.01  # PyTorch nn.LeakyReLU default
LANE = 128


def _round_up(x, m):
    return (x + m - 1) // m * m


def _default_compute_dtype():
    """bf16 intermediates on v6e/v7x (native bf16 VPU); f32 on v5e and older."""
    try:
        kind = jax.devices()[0].device_kind.lower()
    except Exception:
        return jnp.float32
    if any(v in kind for v in ("v2", "v3", "v4", "v5")):
        return jnp.float32
    return jnp.bfloat16


def _vmem_budget_bytes():
    """~75% of physical VMEM (v7x: ~48 of 64 MiB; v5e/v6e: ~96 of 128 MiB)."""
    cap = 64 << 20  # conservative fallback (valid on every generation)
    try:
        cap = int(pltpu.get_tpu_info().vmem_capacity_bytes)
    except Exception:
        pass
    return max(32 << 20, min(cap - (16 << 20), int(cap * 0.75)))


# --------------------------------------------------------------------------- #
# Kernel
# --------------------------------------------------------------------------- #
def attention_ae_begin_kernel(
    x_ref,
    w_enc, b_enc,                                # encoder: Linear(D_pad, H)
    w_vo, b_vo,                                  # fused attention V-proj @ out-proj (H, H)
    w_eo1, b_eo1, w_eo2, b_eo2, w_eo3, b_eo3,    # encoder_out (last layer lane-padded)
    w_cat, b_cat,                                # concat of sd1 | dd1 | r1 (lat_pad, h+q4+r pads)
    w_sd2, b_sd2,                                # shallowdecoder L2 (lane-padded out)
    w_dd2, b_dd2, w_dd3, b_dd3,                  # deepdecoder L2/L3 (L3 lane-padded out)
    w_r2, b_r2,                                  # regressor L2 (lane-padded out)
    enc_out, dec1_out, dec2_out, pred_out,
    *, h_pad, q4_pad, compute_dtype,
):
    def lin(v, w_ref, b_ref):
        # bf16 operands on the MXU, f32 accumulation; bias add stays f32.
        if v.dtype != w_ref.dtype:
            v = v.astype(w_ref.dtype)
        return jnp.dot(v, w_ref[...], preferred_element_type=jnp.float32) + b_ref[...]

    def act(v):
        # LeakyReLU in the compute dtype (bf16 on v6e/v7x halves VALU + vreg work).
        v = v.astype(compute_dtype)
        return jnp.where(v > 0, v, NEG_SLOPE * v)

    x = x_ref[...]

    # encoder: Linear + LeakyReLU (input lane-padded with zero cols / zero rows in w_enc)
    h = act(lin(x, w_enc, b_enc))

    # MultiheadAttention over a length-1 sequence == out_proj(V); V/out fused host-side.
    # TODO(synk): attention dropout (training mode) is not modeled; eval-mode math only.
    a = lin(h, w_vo, b_vo)

    # encoder_out: 3 x (Linear + LeakyReLU).  Last layer is lane-padded to 128;
    # padded columns are exactly 0 (zero weight cols + zero bias, LeakyReLU(0)=0).
    e = act(lin(a, w_eo1, b_eo1))
    e = act(lin(e, w_eo2, b_eo2))
    enc = lin(e, w_eo3, b_eo3)                               # f32
    enc = jnp.where(enc > 0, enc, NEG_SLOPE * enc)           # keep stored `encoded` at f32 fidelity
    enc_out[...] = enc.astype(enc_out.dtype)                 # full-width (unmasked) store

    # One wide MXU call for all three consumers of `encoded`; slices are
    # 128-lane aligned so they stay lane-dense.
    branches = act(lin(enc, w_cat, b_cat))                   # (tb, h_pad + q4_pad + r_pad)
    d1 = branches[:, :h_pad]                                 # shallowdecoder hidden
    d2 = branches[:, h_pad:h_pad + q4_pad]                   # deepdecoder hidden 1
    r = branches[:, h_pad + q4_pad:]                         # regressor hidden

    # shallowdecoder: Linear (output lane-padded)
    dec1_out[...] = lin(d1, w_sd2, b_sd2).astype(dec1_out.dtype)

    # deepdecoder: Linear + LeakyReLU, Linear (output lane-padded)
    d2 = act(lin(d2, w_dd2, b_dd2))
    dec2_out[...] = lin(d2, w_dd3, b_dd3).astype(dec2_out.dtype)

    # regressor: Linear + ReLU (output lane-padded to 128)
    pred_out[...] = jnp.maximum(lin(r, w_r2, b_r2), 0.0).astype(pred_out.dtype)


# --------------------------------------------------------------------------- #
# Host-side parameter preparation
# --------------------------------------------------------------------------- #
def init_params(key, input_dim, latent_dim, hidden_dim):
    """Synthetic parameters mirroring the PyTorch module; weights (in, out), biases (1, out)."""
    dims = [
        (input_dim, hidden_dim),            # encoder
        (hidden_dim, hidden_dim),           # attention V proj
        (hidden_dim, hidden_dim),           # attention out proj
        (hidden_dim, input_dim // 4),       # encoder_out 1
        (input_dim // 4, input_dim // 8),   # encoder_out 2
        (input_dim // 8, latent_dim),       # encoder_out 3
        (latent_dim, hidden_dim),           # shallowdecoder 1
        (hidden_dim, input_dim),            # shallowdecoder 2
        (latent_dim, input_dim // 4),       # deepdecoder 1
        (input_dim // 4, input_dim // 2),   # deepdecoder 2
        (input_dim // 2, input_dim),        # deepdecoder 3
        (latent_dim, latent_dim // 2),      # regressor 1
        (latent_dim // 2, 1),               # regressor 2
    ]
    params = []
    keys = jax.random.split(key, 2 * len(dims))
    for i, (din, dout) in enumerate(dims):
        w = jax.random.normal(keys[2 * i], (din, dout), jnp.float32) * 0.05
        b = jax.random.normal(keys[2 * i + 1], (1, dout), jnp.float32) * 0.05
        params.append((w, b))
    return params


def prepare_params(params):
    """Fuse attention V/out projections, lane-pad every stored tensor path, merge
    the three consumers of `encoded` into one wide weight, cast weights to bf16."""
    ((w_enc, b_enc), (w_v, b_v), (w_o, b_o),
     (w_eo1, b_eo1), (w_eo2, b_eo2), (w_eo3, b_eo3),
     (w_sd1, b_sd1), (w_sd2, b_sd2),
     (w_dd1, b_dd1), (w_dd2, b_dd2), (w_dd3, b_dd3),
     (w_r1, b_r1), (w_r2, b_r2)) = params

    d_in = int(w_enc.shape[0])
    hidden = int(w_enc.shape[1])
    q4 = int(w_dd1.shape[1])           # input_dim // 4
    latent = int(w_eo3.shape[1])
    half_lat = int(w_r1.shape[1])
    d_out = int(w_sd2.shape[1])        # == input_dim

    d_in_pad = _round_up(d_in, LANE)
    lat_pad = _round_up(latent, LANE)
    h_pad = _round_up(hidden, LANE)
    q4_pad = _round_up(q4, LANE)
    r_pad = _round_up(max(half_lat, 1), LANE)
    d_out_pad = _round_up(d_out, LANE)
    pred_pad = LANE

    def pad_cols(w, b, n):
        return (jnp.pad(w, ((0, 0), (0, n - w.shape[1]))),
                jnp.pad(b, ((0, 0), (0, n - b.shape[1]))))

    def pad_rows(w, n):
        return jnp.pad(w, ((0, n - w.shape[0]), (0, 0)))

    # Seq-len-1 attention: softmax over one key == 1 -> attention == out_proj(V);
    # fuse V-proj + out-proj (no nonlinearity in between; exact up to f32 rounding).
    w_vo = w_v @ w_o
    b_vo = b_v @ w_o + b_o

    # Lane-pad the input path: zero x columns are absorbed by zero w_enc rows.
    w_enc = pad_rows(w_enc, d_in_pad)

    # Lane-pad `encoded` (zero cols + zero bias; LeakyReLU(0)=0) and zero-row pad its consumers.
    w_eo3, b_eo3 = pad_cols(w_eo3, b_eo3, lat_pad)
    w_sd1 = pad_rows(w_sd1, lat_pad)
    w_dd1 = pad_rows(w_dd1, lat_pad)
    w_r1 = pad_rows(w_r1, lat_pad)

    # Concatenate the three consumers of `encoded` into one wide matmul; each
    # branch is column-padded to a 128 multiple so the in-kernel slices stay lane-aligned.
    w_sd1, b_sd1 = pad_cols(w_sd1, b_sd1, h_pad)
    w_dd1, b_dd1 = pad_cols(w_dd1, b_dd1, q4_pad)
    w_r1, b_r1 = pad_cols(w_r1, b_r1, r_pad)
    w_cat = jnp.concatenate([w_sd1, w_dd1, w_r1], axis=1)
    b_cat = jnp.concatenate([b_sd1, b_dd1, b_r1], axis=1)

    # Zero-row pad the consumers of the (zero-)padded branch outputs.
    w_sd2 = pad_rows(w_sd2, h_pad)
    w_dd2 = pad_rows(w_dd2, q4_pad)
    w_r2 = pad_rows(w_r2, r_pad)

    # Lane-pad the decoder / regressor outputs so stores are full-width vst.
    w_sd2, b_sd2 = pad_cols(w_sd2, b_sd2, d_out_pad)
    w_dd3, b_dd3 = pad_cols(w_dd3, b_dd3, d_out_pad)
    w_r2, b_r2 = pad_cols(w_r2, b_r2, pred_pad)

    fused = [(w_enc, b_enc), (w_vo, b_vo),
             (w_eo1, b_eo1), (w_eo2, b_eo2), (w_eo3, b_eo3),
             (w_cat, b_cat),
             (w_sd2, b_sd2), (w_dd2, b_dd2), (w_dd3, b_dd3),
             (w_r2, b_r2)]

    # bf16 weights (half the HBM/VMEM bytes, 2x MXU rate on v6e/v7x); biases f32.
    kernel_params = [(w.astype(jnp.bfloat16), b.astype(jnp.float32)) for w, b in fused]

    meta = dict(input_dim=d_in, latent_dim=latent,
                d_in_pad=d_in_pad, lat_pad=lat_pad, h_pad=h_pad, q4_pad=q4_pad,
                r_pad=r_pad, d_out_pad=d_out_pad, pred_pad=pred_pad)
    return kernel_params, meta


# --------------------------------------------------------------------------- #
# Tiling helpers
# --------------------------------------------------------------------------- #
def _per_row_vmem_bytes(meta, kernel_params):
    f32 = 4
    # Double-buffered f32 input tile + 4 double-buffered f32 output tiles.
    io = 2 * f32 * (meta["d_in_pad"]
                    + meta["lat_pad"] + 2 * meta["d_out_pad"] + meta["pred_pad"])
    # Conservative intermediate bound: every layer output live simultaneously in f32.
    inter = f32 * sum(int(w.shape[1]) for w, _ in kernel_params)
    return io + inter


def _resident_weight_bytes(kernel_params):
    total = 0
    for w, b in kernel_params:
        total += int(w.size) * w.dtype.itemsize + int(b.size) * b.dtype.itemsize
    return 2 * total   # Pallas double-buffers every input by default


def _choose_batch_tile(batch, per_row_bytes, resident_bytes, max_tile, vmem_budget):
    avail = max(vmem_budget - resident_bytes, 8 * per_row_bytes)
    cap = int(avail // per_row_bytes)
    cap = max(8, min(cap, max_tile))
    cap -= cap % 8
    n_steps = -(-batch // cap)
    if batch >= 16:
        n_steps = max(n_steps, 2)          # keep both v7x TensorCores busy (free on v5e/v6e)
    tb = -(-batch // n_steps)              # balanced tiles: no mostly-padding last step
    tb = _round_up(tb, 16) if tb > 8 else 8   # multiple of 16 -> full bf16 sublane packing
    return tb, n_steps


# --------------------------------------------------------------------------- #
# Wrapper
# --------------------------------------------------------------------------- #
def attention_ae_begin(x, kernel_params, meta, *, max_batch_tile=1024, compute_dtype=None):
    if compute_dtype is None:
        compute_dtype = _default_compute_dtype()

    B, D = x.shape
    assert D == meta["input_dim"]
    d_in_pad = meta["d_in_pad"]
    lat_pad, d_out_pad, pred_pad = meta["lat_pad"], meta["d_out_pad"], meta["pred_pad"]

    vmem_budget = _vmem_budget_bytes()
    per_row = _per_row_vmem_bytes(meta, kernel_params)
    resident = _resident_weight_bytes(kernel_params)
    tb, n_steps = _choose_batch_tile(B, per_row, resident, max_batch_tile, vmem_budget)
    b_pad = tb * n_steps

    # Batch- and lane-pad the input with zeros (zero rows in w_enc absorb the lane pad).
    x = jnp.pad(x, ((0, b_pad - B), (0, d_in_pad - D)))

    flat_args = [x]
    for w, b in kernel_params:
        flat_args.extend((w, b))

    def row_spec(cols):
        return pl.BlockSpec((tb, cols), lambda i: (i, 0))

    def const_spec(arr):
        # Whole array, same block every grid step -> DMA'd once, VMEM-resident.
        return pl.BlockSpec(arr.shape, lambda i, _nd=arr.ndim: (0,) * _nd)

    in_specs = [row_spec(d_in_pad)]
    for w, b in kernel_params:
        in_specs.append(const_spec(w))
        in_specs.append(const_spec(b))

    out_shape = (
        jax.ShapeDtypeStruct((b_pad, lat_pad), jnp.float32),    # encoded  (lane-padded)
        jax.ShapeDtypeStruct((b_pad, d_out_pad), jnp.float32),  # decoded1 (lane-padded)
        jax.ShapeDtypeStruct((b_pad, d_out_pad), jnp.float32),  # decoded2 (lane-padded)
        jax.ShapeDtypeStruct((b_pad, pred_pad), jnp.float32),   # pred     (lane-padded)
    )
    out_specs = (row_spec(lat_pad), row_spec(d_out_pad),
                 row_spec(d_out_pad), row_spec(pred_pad))

    # Advisory only; slightly overstated because it includes the zero padding.
    flops = 2 * b_pad * sum(int(w.shape[0]) * int(w.shape[1]) for w, _ in kernel_params)
    bytes_accessed = sum(int(a.size) * a.dtype.itemsize for a in flat_args) + sum(
        math.prod(s.shape) * jnp.dtype(s.dtype).itemsize for s in out_shape)

    kernel = functools.partial(
        attention_ae_begin_kernel,
        h_pad=meta["h_pad"], q4_pad=meta["q4_pad"], compute_dtype=compute_dtype)

    enc, dec1, dec2, pred = pl.pallas_call(
        kernel,
        out_shape=out_shape,
        grid=(n_steps,),
        in_specs=in_specs,
        out_specs=out_specs,
        compiler_params=pltpu.CompilerParams(
            dimension_semantics=("parallel",),
            vmem_limit_bytes=int(vmem_budget)),
        cost_estimate=pl.CostEstimate(
            flops=flops, transcendentals=0, bytes_accessed=bytes_accessed),
    )(*flat_args)

    # Slice off batch padding and lane padding outside the kernel.
    L = meta["latent_dim"]
    return enc[:B, :L], dec1[:B, :D], dec2[:B, :D], pred[:B, :1]


# --------------------------------------------------------------------------- #
# Pure-JAX f32 reference (tolerance gate for bf16 deviations)
# --------------------------------------------------------------------------- #
def reference_forward(x, params):
    ((w_enc, b_enc), (w_v, b_v), (w_o, b_o),
     (w_eo1, b_eo1), (w_eo2, b_eo2), (w_eo3, b_eo3),
     (w_sd1, b_sd1), (w_sd2, b_sd2),
     (w_dd1, b_dd1), (w_dd2, b_dd2), (w_dd3, b_dd3),
     (w_r1, b_r1), (w_r2, b_r2)) = params
    lrelu = lambda v: jnp.where(v > 0, v, NEG_SLOPE * v)
    h = lrelu(x @ w_enc + b_enc)
    # seq-len-1 MultiheadAttention (eval): softmax over a single key == 1 -> out_proj(V)
    a = (h @ w_v + b_v) @ w_o + b_o
    e = lrelu(a @ w_eo1 + b_eo1)
    e = lrelu(e @ w_eo2 + b_eo2)
    enc = lrelu(e @ w_eo3 + b_eo3)
    dec1 = lrelu(enc @ w_sd1 + b_sd1) @ w_sd2 + b_sd2
    d2 = lrelu(enc @ w_dd1 + b_dd1)
    d2 = lrelu(d2 @ w_dd2 + b_dd2)
    dec2 = d2 @ w_dd3 + b_dd3
    pred = jnp.maximum(lrelu(enc @ w_r1 + b_r1) @ w_r2 + b_r2, 0.0)
    return enc, dec1, dec2, pred


if __name__ == "__main__":
    # Small shapes consistent with the module's forward pass.
    B = 8
    input_dim = 64
    latent_dim = 16
    hidden_dim = 128  # module default is 512; num_heads is irrelevant at seq-len 1

    key = jax.random.PRNGKey(0)
    k_x, k_p = jax.random.split(key)
    x = jax.random.normal(k_x, (B, input_dim), jnp.float32)
    params = init_params(k_p, input_dim, latent_dim, hidden_dim)
    kernel_params, meta = prepare_params(params)

    outs = jax.block_until_ready(attention_ae_begin(x, kernel_params, meta))
    encoded, decoded1, decoded2, pred = outs

    assert encoded.shape == (B, latent_dim)
    assert decoded1.shape == (B, input_dim)
    assert decoded2.shape == (B, input_dim)
    assert pred.shape == (B, 1)

    # Tolerance-asserted f32 reference (bf16 weights/intermediates -> ~1e-2 rel error).
    ref = reference_forward(x, params)
    for name, got, want in zip(("encoded", "decoded1", "decoded2", "pred"), outs, ref):
        err = float(jnp.max(jnp.abs(got - want)))
        assert err < 5e-2, f"{name}: max abs err {err}"

    print("KERNEL_OK")
</pallas_src>

<mosaic_0001>
module attributes {stable_mosaic.version = 11 : i64} {
  func.func @attention_ae_begin_kernel(%arg0: i32, %arg1: memref<8x128xf32, #tpu.memory_space<vmem>>, %arg2: memref<128x128xbf16, #tpu.memory_space<vmem>>, %arg3: memref<1x128xf32, #tpu.memory_space<vmem>>, %arg4: memref<128x128xbf16, #tpu.memory_space<vmem>>, %arg5: memref<1x128xf32, #tpu.memory_space<vmem>>, %arg6: memref<128x16xbf16, #tpu.memory_space<vmem>>, %arg7: memref<1x16xf32, #tpu.memory_space<vmem>>, %arg8: memref<16x8xbf16, #tpu.memory_space<vmem>>, %arg9: memref<1x8xf32, #tpu.memory_space<vmem>>, %arg10: memref<8x128xbf16, #tpu.memory_space<vmem>>, %arg11: memref<1x128xf32, #tpu.memory_space<vmem>>, %arg12: memref<128x384xbf16, #tpu.memory_space<vmem>>, %arg13: memref<1x384xf32, #tpu.memory_space<vmem>>, %arg14: memref<128x128xbf16, #tpu.memory_space<vmem>>, %arg15: memref<1x128xf32, #tpu.memory_space<vmem>>, %arg16: memref<128x32xbf16, #tpu.memory_space<vmem>>, %arg17: memref<1x32xf32, #tpu.memory_space<vmem>>, %arg18: memref<32x128xbf16, #tpu.memory_space<vmem>>, %arg19: memref<1x128xf32, #tpu.memory_space<vmem>>, %arg20: memref<128x128xbf16, #tpu.memory_space<vmem>>, %arg21: memref<1x128xf32, #tpu.memory_space<vmem>>, %arg22: memref<8x128xf32, #tpu.memory_space<vmem>>, %arg23: memref<8x128xf32, #tpu.memory_space<vmem>>, %arg24: memref<8x128xf32, #tpu.memory_space<vmem>>, %arg25: memref<8x128xf32, #tpu.memory_space<vmem>>) attributes {dimension_semantics = [#tpu.dimension_semantics<parallel>], iteration_bounds = array<i64: 1>, scalar_prefetch = 0 : i64, scratch_operands = 0 : i64, tpu.core_type = #tpu.core_type<tc>, window_params = [{transform_indices = @transform_0, window_bounds = array<i64: 8, 128>}, {pipeline_mode = #tpu.pipeline_mode<synchronous>, transform_indices = @transform_1, window_bounds = array<i64: 128, 128>}, {pipeline_mode = #tpu.pipeline_mode<synchronous>, transform_indices = @transform_2, window_bounds = array<i64: 1, 128>}, {pipeline_mode = #tpu.pipeline_mode<synchronous>, transform_indices = @transform_3, window_bounds = array<i64: 128, 128>}, {pipeline_mode = #tpu.pipeline_mode<synchronous>, transform_indices = @transform_4, window_bounds = array<i64: 1, 128>}, {pipeline_mode = #tpu.pipeline_mode<synchronous>, transform_indices = @transform_5, window_bounds = array<i64: 128, 16>}, {pipeline_mode = #tpu.pipeline_mode<synchronous>, transform_indices = @transform_6, window_bounds = array<i64: 1, 16>}, {pipeline_mode = #tpu.pipeline_mode<synchronous>, transform_indices = @transform_7, window_bounds = array<i64: 16, 8>}, {pipeline_mode = #tpu.pipeline_mode<synchronous>, transform_indices = @transform_8, window_bounds = array<i64: 1, 8>}, {pipeline_mode = #tpu.pipeline_mode<synchronous>, transform_indices = @transform_9, window_bounds = array<i64: 8, 128>}, {pipeline_mode = #tpu.pipeline_mode<synchronous>, transform_indices = @transform_10, window_bounds = array<i64: 1, 128>}, {pipeline_mode = #tpu.pipeline_mode<synchronous>, transform_indices = @transform_11, window_bounds = array<i64: 128, 384>}, {pipeline_mode = #tpu.pipeline_mode<synchronous>, transform_indices = @transform_12, window_bounds = array<i64: 1, 384>}, {pipeline_mode = #tpu.pipeline_mode<synchronous>, transform_indices = @transform_13, window_bounds = array<i64: 128, 128>}, {pipeline_mode = #tpu.pipeline_mode<synchronous>, transform_indices = @transform_14, window_bounds = array<i64: 1, 128>}, {pipeline_mode = #tpu.pipeline_mode<synchronous>, transform_indices = @transform_15, window_bounds = array<i64: 128, 32>}, {pipeline_mode = #tpu.pipeline_mode<synchronous>, transform_indices = @transform_16, window_bounds = array<i64: 1, 32>}, {pipeline_mode = #tpu.pipeline_mode<synchronous>, transform_indices = @transform_17, window_bounds = array<i64: 32, 128>}, {pipeline_mode = #tpu.pipeline_mode<synchronous>, transform_indices = @transform_18, window_bounds = array<i64: 1, 128>}, {pipeline_mode = #tpu.pipeline_mode<synchronous>, transform_indices = @transform_19, window_bounds = array<i64: 128, 128>}, {pipeline_mode = #tpu.pipeline_mode<synchronous>, transform_indices = @transform_20, window_bounds = array<i64: 1, 128>}, {transform_indices = @transform_21, window_bounds = array<i64: 8, 128>}, {transform_indices = @transform_22, window_bounds = array<i64: 8, 128>}, {transform_indices = @transform_23, window_bounds = array<i64: 8, 128>}, {transform_indices = @transform_24, window_bounds = array<i64: 8, 128>}]} {
    %c0 = arith.constant 0 : index
    %c0_0 = arith.constant 0 : index
    %0 = vector.load %arg1[%c0, %c0_0] : memref<8x128xf32, #tpu.memory_space<vmem>>, vector<8x128xf32>
    %1 = arith.truncf %0 : vector<8x128xf32> to vector<8x128xbf16>
    %c0_1 = arith.constant 0 : index
    %c0_2 = arith.constant 0 : index
    %2 = vector.load %arg2[%c0_1, %c0_2] : memref<128x128xbf16, #tpu.memory_space<vmem>>, vector<128x128xbf16>
    %cst = arith.constant dense<0.000000e+00> : vector<8x128xf32>
    %3 = tpu.matmul %1, %2, %cst {dimension_numbers = #tpu.dot_dimension_numbers<[1], [0], [0], [1], [0, 0, 1, 1], [], []>} : vector<8x128xbf16>, vector<128x128xbf16>, vector<8x128xf32> -> vector<8x128xf32>
    %c0_3 = arith.constant 0 : index
    %c0_4 = arith.constant 0 : index
    %4 = vector.load %arg3[%c0_3, %c0_4] : memref<1x128xf32, #tpu.memory_space<vmem>>, vector<1x128xf32>
    %5 = vector.broadcast %4 : vector<1x128xf32> to vector<8x128xf32>
    %6 = arith.addf %3, %5 : vector<8x128xf32>
    %7 = arith.truncf %6 : vector<8x128xf32> to vector<8x128xbf16>
    %cst_5 = arith.constant 0.000000e+00 : bf16
    %8 = vector.broadcast %cst_5 : bf16 to vector<8x128xbf16>
    %9 = arith.cmpf ogt, %7, %8 : vector<8x128xbf16>
    %cst_6 = arith.constant 1.000980e-02 : bf16
    %10 = vector.broadcast %cst_6 : bf16 to vector<8x128xbf16>
    %11 = arith.mulf %10, %7 : vector<8x128xbf16>
    %12 = arith.select %9, %7, %11 : vector<8x128xi1>, vector<8x128xbf16>
    %c0_7 = arith.constant 0 : index
    %c0_8 = arith.constant 0 : index
    %13 = vector.load %arg4[%c0_7, %c0_8] : memref<128x128xbf16, #tpu.memory_space<vmem>>, vector<128x128xbf16>
    %cst_9 = arith.constant dense<0.000000e+00> : vector<8x128xf32>
    %14 = tpu.matmul %12, %13, %cst_9 {dimension_numbers = #tpu.dot_dimension_numbers<[1], [0], [0], [1], [0, 0, 1, 1], [], []>} : vector<8x128xbf16>, vector<128x128xbf16>, vector<8x128xf32> -> vector<8x128xf32>
    %c0_10 = arith.constant 0 : index
    %c0_11 = arith.constant 0 : index
    %15 = vector.load %arg5[%c0_10, %c0_11] : memref<1x128xf32, #tpu.memory_space<vmem>>, vector<1x128xf32>
    %16 = vector.broadcast %15 : vector<1x128xf32> to vector<8x128xf32>
    %17 = arith.addf %14, %16 : vector<8x128xf32>
    %18 = arith.truncf %17 : vector<8x128xf32> to vector<8x128xbf16>
    %c0_12 = arith.constant 0 : index
    %c0_13 = arith.constant 0 : index
    %19 = vector.load %arg6[%c0_12, %c0_13] : memref<128x16xbf16, #tpu.memory_space<vmem>>, vector<128x16xbf16>
    %cst_14 = arith.constant dense<0.000000e+00> : vector<8x16xf32>
    %20 = tpu.matmul %18, %19, %cst_14 {dimension_numbers = #tpu.dot_dimension_numbers<[1], [0], [0], [1], [0, 0, 1, 1], [], []>} : vector<8x128xbf16>, vector<128x16xbf16>, vector<8x16xf32> -> vector<8x16xf32>
    %c0_15 = arith.constant 0 : index
    %c0_16 = arith.constant 0 : index
    %21 = vector.load %arg7[%c0_15, %c0_16] : memref<1x16xf32, #tpu.memory_space<vmem>>, vector<1x16xf32>
    %22 = vector.broadcast %21 : vector<1x16xf32> to vector<8x16xf32>
    %23 = arith.addf %20, %22 : vector<8x16xf32>
    %24 = arith.truncf %23 : vector<8x16xf32> to vector<8x16xbf16>
    %cst_17 = arith.constant 0.000000e+00 : bf16
    %25 = vector.broadcast %cst_17 : bf16 to vector<8x16xbf16>
    %26 = arith.cmpf ogt, %24, %25 : vector<8x16xbf16>
    %cst_18 = arith.constant 1.000980e-02 : bf16
    %27 = vector.broadcast %cst_18 : bf16 to vector<8x16xbf16>
    %28 = arith.mulf %27, %24 : vector<8x16xbf16>
    %29 = arith.select %26, %24, %28 : vector<8x16xi1>, vector<8x16xbf16>
    %c0_19 = arith.constant 0 : index
    %c0_20 = arith.constant 0 : index
    %30 = vector.load %arg8[%c0_19, %c0_20] : memref<16x8xbf16, #tpu.memory_space<vmem>>, vector<16x8xbf16>
    %cst_21 = arith.constant dense<0.000000e+00> : vector<8x8xf32>
    %31 = tpu.matmul %29, %30, %cst_21 {dimension_numbers = #tpu.dot_dimension_numbers<[1], [0], [0], [1], [0, 0, 1, 1], [], []>} : vector<8x16xbf16>, vector<16x8xbf16>, vector<8x8xf32> -> vector<8x8xf32>
    %c0_22 = arith.constant 0 : index
    %c0_23 = arith.constant 0 : index
    %32 = vector.load %arg9[%c0_22, %c0_23] : memref<1x8xf32, #tpu.memory_space<vmem>>, vector<1x8xf32>
    %33 = vector.broadcast %32 : vector<1x8xf32> to vector<8x8xf32>
    %34 = arith.addf %31, %33 : vector<8x8xf32>
    %35 = arith.truncf %34 : vector<8x8xf32> to vector<8x8xbf16>
    %cst_24 = arith.constant 0.000000e+00 : bf16
    %36 = vector.broadcast %cst_24 : bf16 to vector<8x8xbf16>
    %37 = arith.cmpf ogt, %35, %36 : vector<8x8xbf16>
    %cst_25 = arith.constant 1.000980e-02 : bf16
    %38 = vector.broadcast %cst_25 : bf16 to vector<8x8xbf16>
    %39 = arith.mulf %38, %35 : vector<8x8xbf16>
    %40 = arith.select %37, %35, %39 : vector<8x8xi1>, vector<8x8xbf16>
    %c0_26 = arith.constant 0 : index
    %c0_27 = arith.constant 0 : index
    %41 = vector.load %arg10[%c0_26, %c0_27] : memref<8x128xbf16, #tpu.memory_space<vmem>>, vector<8x128xbf16>
    %cst_28 = arith.constant dense<0.000000e+00> : vector<8x128xf32>
    %42 = tpu.matmul %40, %41, %cst_28 {dimension_numbers = #tpu.dot_dimension_numbers<[1], [0], [0], [1], [0, 0, 1, 1], [], []>} : vector<8x8xbf16>, vector<8x128xbf16>, vector<8x128xf32> -> vector<8x128xf32>
    %c0_29 = arith.constant 0 : index
    %c0_30 = arith.constant 0 : index
    %43 = vector.load %arg11[%c0_29, %c0_30] : memref<1x128xf32, #tpu.memory_space<vmem>>, vector<1x128xf32>
    %44 = vector.broadcast %43 : vector<1x128xf32> to vector<8x128xf32>
    %45 = arith.addf %42, %44 : vector<8x128xf32>
    %cst_31 = arith.constant 0.000000e+00 : f32
    %46 = vector.broadcast %cst_31 : f32 to vector<8x128xf32>
    %47 = arith.cmpf ogt, %45, %46 : vector<8x128xf32>
    %cst_32 = arith.constant 0.00999999977 : f32
    %48 = vector.broadcast %cst_32 : f32 to vector<8x128xf32>
    %49 = arith.mulf %48, %45 : vector<8x128xf32>
    %50 = arith.select %47, %45, %49 : vector<8x128xi1>, vector<8x128xf32>
    %c0_33 = arith.constant 0 : index
    %c0_34 = arith.constant 0 : index
    %51 = vector.load %arg22[%c0_33, %c0_34] : memref<8x128xf32, #tpu.memory_space<vmem>>, vector<8x128xf32>
    tpu.vector_store %arg22[%c0_33, %c0_34], %50 {strides = array<i32>} : memref<8x128xf32, #tpu.memory_space<vmem>>, vector<8x128xf32>,
    %52 = arith.truncf %50 : vector<8x128xf32> to vector<8x128xbf16>
    %c0_35 = arith.constant 0 : index
    %c0_36 = arith.constant 0 : index
    %53 = vector.load %arg12[%c0_35, %c0_36] : memref<128x384xbf16, #tpu.memory_space<vmem>>, vector<128x384xbf16>
    %cst_37 = arith.constant dense<0.000000e+00> : vector<8x384xf32>
    %54 = tpu.matmul %52, %53, %cst_37 {dimension_numbers = #tpu.dot_dimension_numbers<[1], [0], [0], [1], [0, 0, 1, 1], [], []>} : vector<8x128xbf16>, vector<128x384xbf16>, vector<8x384xf32> -> vector<8x384xf32>
    %c0_38 = arith.constant 0 : index
    %c0_39 = arith.constant 0 : index
    %55 = vector.load %arg13[%c0_38, %c0_39] : memref<1x384xf32, #tpu.memory_space<vmem>>, vector<1x384xf32>
    %56 = vector.broadcast %55 : vector<1x384xf32> to vector<8x384xf32>
    %57 = arith.addf %54, %56 : vector<8x384xf32>
    %58 = arith.truncf %57 : vector<8x384xf32> to vector<8x384xbf16>
    %cst_40 = arith.constant 0.000000e+00 : bf16
    %59 = vector.broadcast %cst_40 : bf16 to vector<8x384xbf16>
    %60 = arith.cmpf ogt, %58, %59 : vector<8x384xbf16>
    %cst_41 = arith.constant 1.000980e-02 : bf16
    %61 = vector.broadcast %cst_41 : bf16 to vector<8x384xbf16>
    %62 = arith.mulf %61, %58 : vector<8x384xbf16>
    %63 = arith.select %60, %58, %62 : vector<8x384xi1>, vector<8x384xbf16>
    %64 = vector.extract_strided_slice %63 {offsets = [0, 0], sizes = [8, 128], strides = [1, 1]} : vector<8x384xbf16> to vector<8x128xbf16>
    %65 = vector.extract_strided_slice %63 {offsets = [0, 128], sizes = [8, 128], strides = [1, 1]} : vector<8x384xbf16> to vector<8x128xbf16>
    %66 = vector.extract_strided_slice %63 {offsets = [0, 256], sizes = [8, 128], strides = [1, 1]} : vector<8x384xbf16> to vector<8x128xbf16>
    %c0_42 = arith.constant 0 : index
    %c0_43 = arith.constant 0 : index
    %67 = vector.load %arg14[%c0_42, %c0_43] : memref<128x128xbf16, #tpu.memory_space<vmem>>, vector<128x128xbf16>
    %cst_44 = arith.constant dense<0.000000e+00> : vector<8x128xf32>
    %68 = tpu.matmul %64, %67, %cst_44 {dimension_numbers = #tpu.dot_dimension_numbers<[1], [0], [0], [1], [0, 0, 1, 1], [], []>} : vector<8x128xbf16>, vector<128x128xbf16>, vector<8x128xf32> -> vector<8x128xf32>
    %c0_45 = arith.constant 0 : index
    %c0_46 = arith.constant 0 : index
    %69 = vector.load %arg15[%c0_45, %c0_46] : memref<1x128xf32, #tpu.memory_space<vmem>>, vector<1x128xf32>
    %70 = vector.broadcast %69 : vector<1x128xf32> to vector<8x128xf32>
    %71 = arith.addf %68, %70 : vector<8x128xf32>
    %c0_47 = arith.constant 0 : index
    %c0_48 = arith.constant 0 : index
    %72 = vector.load %arg23[%c0_47, %c0_48] : memref<8x128xf32, #tpu.memory_space<vmem>>, vector<8x128xf32>
    tpu.vector_store %arg23[%c0_47, %c0_48], %71 {strides = array<i32>} : memref<8x128xf32, #tpu.memory_space<vmem>>, vector<8x128xf32>,
    %c0_49 = arith.constant 0 : index
    %c0_50 = arith.constant 0 : index
    %73 = vector.load %arg16[%c0_49, %c0_50] : memref<128x32xbf16, #tpu.memory_space<vmem>>, vector<128x32xbf16>
    %cst_51 = arith.constant dense<0.000000e+00> : vector<8x32xf32>
    %74 = tpu.matmul %65, %73, %cst_51 {dimension_numbers = #tpu.dot_dimension_numbers<[1], [0], [0], [1], [0, 0, 1, 1], [], []>} : vector<8x128xbf16>, vector<128x32xbf16>, vector<8x32xf32> -> vector<8x32xf32>
    %c0_52 = arith.constant 0 : index
    %c0_53 = arith.constant 0 : index
    %75 = vector.load %arg17[%c0_52, %c0_53] : memref<1x32xf32, #tpu.memory_space<vmem>>, vector<1x32xf32>
    %76 = vector.broadcast %75 : vector<1x32xf32> to vector<8x32xf32>
    %77 = arith.addf %74, %76 : vector<8x32xf32>
    %78 = arith.truncf %77 : vector<8x32xf32> to vector<8x32xbf16>
    %cst_54 = arith.constant 0.000000e+00 : bf16
    %79 = vector.broadcast %cst_54 : bf16 to vector<8x32xbf16>
    %80 = arith.cmpf ogt, %78, %79 : vector<8x32xbf16>
    %cst_55 = arith.constant 1.000980e-02 : bf16
    %81 = vector.broadcast %cst_55 : bf16 to vector<8x32xbf16>
    %82 = arith.mulf %81, %78 : vector<8x32xbf16>
    %83 = arith.select %80, %78, %82 : vector<8x32xi1>, vector<8x32xbf16>
    %c0_56 = arith.constant 0 : index
    %c0_57 = arith.constant 0 : index
    %84 = vector.load %arg18[%c0_56, %c0_57] : memref<32x128xbf16, #tpu.memory_space<vmem>>, vector<32x128xbf16>
    %cst_58 = arith.constant dense<0.000000e+00> : vector<8x128xf32>
    %85 = tpu.matmul %83, %84, %cst_58 {dimension_numbers = #tpu.dot_dimension_numbers<[1], [0], [0], [1], [0, 0, 1, 1], [], []>} : vector<8x32xbf16>, vector<32x128xbf16>, vector<8x128xf32> -> vector<8x128xf32>
    %c0_59 = arith.constant 0 : index
    %c0_60 = arith.constant 0 : index
    %86 = vector.load %arg19[%c0_59, %c0_60] : memref<1x128xf32, #tpu.memory_space<vmem>>, vector<1x128xf32>
    %87 = vector.broadcast %86 : vector<1x128xf32> to vector<8x128xf32>
    %88 = arith.addf %85, %87 : vector<8x128xf32>
    %c0_61 = arith.constant 0 : index
    %c0_62 = arith.constant 0 : index
    %89 = vector.load %arg24[%c0_61, %c0_62] : memref<8x128xf32, #tpu.memory_space<vmem>>, vector<8x128xf32>
    tpu.vector_store %arg24[%c0_61, %c0_62], %88 {strides = array<i32>} : memref<8x128xf32, #tpu.memory_space<vmem>>, vector<8x128xf32>,
    %c0_63 = arith.constant 0 : index
    %c0_64 = arith.constant 0 : index
    %90 = vector.load %arg20[%c0_63, %c0_64] : memref<128x128xbf16, #tpu.memory_space<vmem>>, vector<128x128xbf16>
    %cst_65 = arith.constant dense<0.000000e+00> : vector<8x128xf32>
    %91 = tpu.matmul %66, %90, %cst_65 {dimension_numbers = #tpu.dot_dimension_numbers<[1], [0], [0], [1], [0, 0, 1, 1], [], []>} : vector<8x128xbf16>, vector<128x128xbf16>, vector<8x128xf32> -> vector<8x128xf32>
    %c0_66 = arith.constant 0 : index
    %c0_67 = arith.constant 0 : index
    %92 = vector.load %arg21[%c0_66, %c0_67] : memref<1x128xf32, #tpu.memory_space<vmem>>, vector<1x128xf32>
    %93 = vector.broadcast %92 : vector<1x128xf32> to vector<8x128xf32>
    %94 = arith.addf %91, %93 : vector<8x128xf32>
    %cst_68 = arith.constant 0.000000e+00 : f32
    %95 = vector.broadcast %cst_68 : f32 to vector<8x128xf32>
    %96 = arith.maximumf %94, %95 : vector<8x128xf32>
    %c0_69 = arith.constant 0 : index
    %c0_70 = arith.constant 0 : index
    %97 = vector.load %arg25[%c0_69, %c0_70] : memref<8x128xf32, #tpu.memory_space<vmem>>, vector<8x128xf32>
    tpu.vector_store %arg25[%c0_69, %c0_70], %96 {strides = array<i32>} : memref<8x128xf32, #tpu.memory_space<vmem>>, vector<8x128xf32>,
    return
  }
  func.func @transform_0(%arg0: i32) -> (i32, i32) {
    %c0_i32 = arith.constant 0 : i32
    %c0_i32_0 = arith.constant 0 : i32
    return %arg0, %c0_i32 : i32, i32
  }
  func.func @transform_1(%arg0: i32) -> (i32, i32) {
    %c0_i32 = arith.constant 0 : i32
    %c0_i32_0 = arith.constant 0 : i32
    %c0_i32_1 = arith.constant 0 : i32
    return %c0_i32, %c0_i32_0 : i32, i32
  }
  func.func @transform_2(%arg0: i32) -> (i32, i32) {
    %c0_i32 = arith.constant 0 : i32
    %c0_i32_0 = arith.constant 0 : i32
    %c0_i32_1 = arith.constant 0 : i32
    return %c0_i32, %c0_i32_0 : i32, i32
  }
  func.func @transform_3(%arg0: i32) -> (i32, i32) {
    %c0_i32 = arith.constant 0 : i32
    %c0_i32_0 = arith.constant 0 : i32
    %c0_i32_1 = arith.constant 0 : i32
    return %c0_i32, %c0_i32_0 : i32, i32
  }
  func.func @transform_4(%arg0: i32) -> (i32, i32) {
    %c0_i32 = arith.constant 0 : i32
    %c0_i32_0 = arith.constant 0 : i32
    %c0_i32_1 = arith.constant 0 : i32
    return %c0_i32, %c0_i32_0 : i32, i32
  }
  func.func @transform_5(%arg0: i32) -> (i32, i32) {
    %c0_i32 = arith.constant 0 : i32
    %c0_i32_0 = arith.constant 0 : i32
    %c0_i32_1 = arith.constant 0 : i32
    return %c0_i32, %c0_i32_0 : i32, i32
  }
  func.func @transform_6(%arg0: i32) -> (i32, i32) {
    %c0_i32 = arith.constant 0 : i32
    %c0_i32_0 = arith.constant 0 : i32
    %c0_i32_1 = arith.constant 0 : i32
    return %c0_i32, %c0_i32_0 : i32, i32
  }
  func.func @transform_7(%arg0: i32) -> (i32, i32) {
    %c0_i32 = arith.constant 0 : i32
    %c0_i32_0 = arith.constant 0 : i32
    %c0_i32_1 = arith.constant 0 : i32
    return %c0_i32, %c0_i32_0 : i32, i32
  }
  func.func @transform_8(%arg0: i32) -> (i32, i32) {
    %c0_i32 = arith.constant 0 : i32
    %c0_i32_0 = arith.constant 0 : i32
    %c0_i32_1 = arith.constant 0 : i32
    return %c0_i32, %c0_i32_0 : i32, i32
  }
  func.func @transform_9(%arg0: i32) -> (i32, i32) {
    %c0_i32 = arith.constant 0 : i32
    %c0_i32_0 = arith.constant 0 : i32
    %c0_i32_1 = arith.constant 0 : i32
    return %c0_i32, %c0_i32_0 : i32, i32
  }
  func.func @transform_10(%arg0: i32) -> (i32, i32) {
    %c0_i32 = arith.constant 0 : i32
    %c0_i32_0 = arith.constant 0 : i32
    %c0_i32_1 = arith.constant 0 : i32
    return %c0_i32, %c0_i32_0 : i32, i32
  }
  func.func @transform_11(%arg0: i32) -> (i32, i32) {
    %c0_i32 = arith.constant 0 : i32
    %c0_i32_0 = arith.constant 0 : i32
    %c0_i32_1 = arith.constant 0 : i32
    return %c0_i32, %c0_i32_0 : i32, i32
  }
  func.func @transform_12(%arg0: i32) -> (i32, i32) {
    %c0_i32 = arith.constant 0 : i32
    %c0_i32_0 = arith.constant 0 : i32
    %c0_i32_1 = arith.constant 0 : i32
    return %c0_i32, %c0_i32_0 : i32, i32
  }
  func.func @transform_13(%arg0: i32) -> (i32, i32) {
    %c0_i32 = arith.constant 0 : i32
    %c0_i32_0 = arith.constant 0 : i32
    %c0_i32_1 = arith.constant 0 : i32
    return %c0_i32, %c0_i32_0 : i32, i32
  }
  func.func @transform_14(%arg0: i32) -> (i32, i32) {
    %c0_i32 = arith.constant 0 : i32
    %c0_i32_0 = arith.constant 0 : i32
    %c0_i32_1 = arith.constant 0 : i32
    return %c0_i32, %c0_i32_0 : i32, i32
  }
  func.func @transform_15(%arg0: i32) -> (i32, i32) {
    %c0_i32 = arith.constant 0 : i32
    %c0_i32_0 = arith.constant 0 : i32
    %c0_i32_1 = arith.constant 0 : i32
    return %c0_i32, %c0_i32_0 : i32, i32
  }
  func.func @transform_16(%arg0: i32) -> (i32, i32) {
    %c0_i32 = arith.constant 0 : i32
    %c0_i32_0 = arith.constant 0 : i32
    %c0_i32_1 = arith.constant 0 : i32
    return %c0_i32, %c0_i32_0 : i32, i32
  }
  func.func @transform_17(%arg0: i32) -> (i32, i32) {
    %c0_i32 = arith.constant 0 : i32
    %c0_i32_0 = arith.constant 0 : i32
    %c0_i32_1 = arith.constant 0 : i32
    return %c0_i32, %c0_i32_0 : i32, i32
  }
  func.func @transform_18(%arg0: i32) -> (i32, i32) {
    %c0_i32 = arith.constant 0 : i32
    %c0_i32_0 = arith.constant 0 : i32
    %c0_i32_1 = arith.constant 0 : i32
    return %c0_i32, %c0_i32_0 : i32, i32
  }
  func.func @transform_19(%arg0: i32) -> (i32, i32) {
    %c0_i32 = arith.constant 0 : i32
    %c0_i32_0 = arith.constant 0 : i32
    %c0_i32_1 = arith.constant 0 : i32
    return %c0_i32, %c0_i32_0 : i32, i32
  }
  func.func @transform_20(%arg0: i32) -> (i32, i32) {
    %c0_i32 = arith.constant 0 : i32
    %c0_i32_0 = arith.constant 0 : i32
    %c0_i32_1 = arith.constant 0 : i32
    return %c0_i32, %c0_i32_0 : i32, i32
  }
  func.func @transform_21(%arg0: i32) -> (i32, i32) {
    %c0_i32 = arith.constant 0 : i32
    %c0_i32_0 = arith.constant 0 : i32
    return %arg0, %c0_i32 : i32, i32
  }
  func.func @transform_22(%arg0: i32) -> (i32, i32) {
    %c0_i32 = arith.constant 0 : i32
    %c0_i32_0 = arith.constant 0 : i32
    return %arg0, %c0_i32 : i32, i32
  }
  func.func @transform_23(%arg0: i32) -> (i32, i32) {
    %c0_i32 = arith.constant 0 : i32
    %c0_i32_0 = arith.constant 0 : i32
    return %arg0, %c0_i32 : i32, i32
  }
  func.func @transform_24(%arg0: i32) -> (i32, i32) {
    %c0_i32 = arith.constant 0 : i32
    %c0_i32_0 = arith.constant 0 : i32
    return %arg0, %c0_i32 : i32, i32
  }
}

</mosaic_0001>

<llo_original>
// kernel: tpu_custom_call.1
$region0: #{tpu_custom_call.1}
  #allocation0 [shape = 'u32[]', space=smem, size = 0x4, offset = 0x4, fixed_abs, tag = 'smem constant byte address 0x4 - core index']
  #allocation1 [shape = 'u32[72,128]{1,0:T(1,128)}', space=vmem, size = 0x9000, scoped, tag = 'internal scratch']
  %s0 = inlined_call_operand.hbm [shape: f32[8,128], index: 0, kind: input, shape index: {}]
  %s1 = inlined_call_operand.vmem [shape: bf16[128,128], index: 1, kind: input, shape index: {}]
  %s2 = inlined_call_operand.hbm [shape: f32[1,128], index: 2, kind: input, shape index: {}]
  %s3 = inlined_call_operand.vmem [shape: bf16[128,128], index: 3, kind: input, shape index: {}]
  %s4 = inlined_call_operand.hbm [shape: f32[1,128], index: 4, kind: input, shape index: {}]
  %s5 = inlined_call_operand.vmem [shape: bf16[128,16], index: 5, kind: input, shape index: {}]
  %s6 = inlined_call_operand.hbm [shape: f32[1,16], index: 6, kind: input, shape index: {}]
  %s7 = inlined_call_operand.vmem [shape: bf16[16,8], index: 7, kind: input, shape index: {}]
  %s8 = inlined_call_operand.hbm [shape: f32[1,8], index: 8, kind: input, shape index: {}]
  %s9 = inlined_call_operand.hbm [shape: bf16[8,128], index: 9, kind: input, shape index: {}]
  %s10 = inlined_call_operand.vmem [shape: f32[1,128], index: 10, kind: input, shape index: {}]
  %s11 = inlined_call_operand.hbm [shape: bf16[128,384], index: 11, kind: input, shape index: {}]
  %s12 = inlined_call_operand.vmem [shape: f32[1,384], index: 12, kind: input, shape index: {}]
  %s13 = inlined_call_operand.hbm [shape: bf16[128,128], index: 13, kind: input, shape index: {}]
  %s14 = inlined_call_operand.vmem [shape: f32[1,128], index: 14, kind: input, shape index: {}]
  %s15 = inlined_call_operand.vmem [shape: bf16[128,32], index: 15, kind: input, shape index: {}]
  %s16 = inlined_call_operand.vmem [shape: f32[1,32], index: 16, kind: input, shape index: {}]
  %s17 = inlined_call_operand.vmem [shape: bf16[32,128], index: 17, kind: input, shape index: {}]
  %s18 = inlined_call_operand.vmem [shape: f32[1,128], index: 18, kind: input, shape index: {}]
  %s19 = inlined_call_operand.hbm [shape: bf16[128,128], index: 19, kind: input, shape index: {}]
  %s20 = inlined_call_operand.vmem [shape: f32[1,128], index: 20, kind: input, shape index: {}]
  %s21 = inlined_call_operand.hbm [shape: f32[8,128], index: 21, kind: output, shape index: {0}]
  %s22 = inlined_call_operand.hbm [shape: f32[8,128], index: 22, kind: output, shape index: {1}]
  %s23 = inlined_call_operand.hbm [shape: f32[8,128], index: 23, kind: output, shape index: {2}]
  %s24 = inlined_call_operand.hbm [shape: f32[8,128], index: 24, kind: output, shape index: {3}]
  %25 = xla_tuple %s21, %s22, %s23, %s24
  %s26 = sld [smem:[#allocation0]]
  $region154: #{tpu_custom_call.1} parent=0
    _
  %s28 = ssub.s32 1, %s26
  %s29 = scalar_select 0, %s28, %s26
  $region1: #{tpu_custom_call.1} parent=0
    #allocation2 [shape = 'u8[4096]{0}', space=vmem, size = 0x1000, scoped, tag = 'input window, operand 0, single buffered']
    #allocation3 [shape = 's32[1]{0}', space=sflag, size = 0x4, scoped, tag = 'scoped memory for tpu_custom_call.1']
    #allocation4 [shape = 's32[1]{0}', space=sflag, size = 0x4, scoped, tag = 'scoped memory for tpu_custom_call.1']
    #allocation5 [shape = 'u8[512]{0}', space=vmem, size = 0x400, scoped, tag = 'input window, operand 2, single buffered']
    #allocation6 [shape = 's32[1]{0}', space=sflag, size = 0x4, scoped, tag = 'scoped memory for tpu_custom_call.1']
    #allocation7 [shape = 'u8[512]{0}', space=vmem, size = 0x400, scoped, tag = 'input window, operand 4, single buffered']
    #allocation8 [shape = 'u8[512]{0}', space=vmem, size = 0x400, scoped, tag = 'input window, operand 6, single buffered']
    #allocation9 [shape = 's32[1]{0}', space=sflag, size = 0x4, scoped, tag = 'scoped memory for tpu_custom_call.1']
    #allocation10 [shape = 'u8[512]{0}', space=vmem, size = 0x400, scoped, tag = 'input window, operand 8, single buffered']
    #allocation11 [shape = 'u8[2048]{0}', space=vmem, size = 0x800, scoped, tag = 'input window, operand 9, single buffered']
    #allocation12 [shape = 's32[1]{0}', space=sflag, size = 0x4, scoped, tag = 'scoped memory for tpu_custom_call.1']
    #allocation13 [shape = 'u8[98304]{0}', space=vmem, size = 0x18000, scoped, tag = 'input window, operand 11, single buffered']
    #allocation14 [shape = 'u8[32768]{0}', space=vmem, size = 0x8000, scoped, tag = 'input window, operand 13, single buffered']
    #allocation15 [shape = 's32[1]{0}', space=sflag, size = 0x4, scoped, tag = 'scoped memory for tpu_custom_call.1']
    #allocation16 [shape = 'u8[32768]{0}', space=vmem, size = 0x8000, scoped, tag = 'input window, operand 19, single buffered']
    #allocation17 [shape = 'u8[4096]{0}', space=vmem, size = 0x1000, scoped, tag = 'output window, operand 0, single buffered']
    #allocation18 [shape = 'u8[4096]{0}', space=vmem, size = 0x1000, scoped, tag = 'output window, operand 1, single buffered']
    #allocation19 [shape = 's32[1]{0}', space=sflag, size = 0x4, scoped, tag = 'scoped memory for tpu_custom_call.1']
    #allocation20 [shape = 'u8[4096]{0}', space=vmem, size = 0x1000, scoped, tag = 'output window, operand 2, single buffered']
    #allocation21 [shape = 'u8[4096]{0}', space=vmem, size = 0x1000, scoped, tag = 'output window, operand 3, single buffered']
    #allocation22 [shape = 's32[1]{0}', space=sflag, size = 0x4, scoped, tag = 'scoped memory for tpu_custom_call.1']
    %30 = vsyncpa [#allocation3], 0
    %31 = vsyncpa [#allocation6], 0
    %32 = vsyncpa [#allocation9], 0
    %33 = vsyncpa [#allocation12], 0
    %34 = vsyncpa [#allocation15], 0
    %35 = vsyncpa [#allocation4], 0
    %36 = vsyncpa [#allocation19], 0
    %37 = vsyncpa [#allocation22], 0
    // Predicated region
    $region2: #{tpu_custom_call.1} parent=1 // pred_check
      _
    $region3: #{tpu_custom_call.1} parent=1 // pred_check_branch
      %39 = sbr.rel (0) target = $region5
    $region4: #{tpu_custom_call.1} parent=1 // pred_region
      %41 = vsyncadd [#allocation3], 0
      %s43 = sshll.u32 %s0, 4
      %s44 = int_to_ptr.hbm [resolvable:$true] %s43
      %s45 = sshll.u32 [#allocation2], 4
      %s46 = int_to_ptr.vmem [resolvable:$true] %s45
      %48 = dma.hbm_to_vmem [thread:$0]  %s44, 128, %s46, [#allocation3]
    $region5: #{tpu_custom_call.1} parent=1 // pred_fallthru
      _
    // Predicated region
    $region6: #{tpu_custom_call.1} parent=1 // pred_check
      _
    $region7: #{tpu_custom_call.1} parent=1 // pred_check_branch
      %50 = sbr.rel (0) target = $region9
    $region8: #{tpu_custom_call.1} parent=1 // pred_region
      _
    $region9: #{tpu_custom_call.1} parent=1 // pred_fallthru
      _
    // Predicated region
    $region10: #{tpu_custom_call.1} parent=1 // pred_check
      _
    $region11: #{tpu_custom_call.1} parent=1 // pred_check_branch
      %52 = sbr.rel (0) target = $region13
    $region12: #{tpu_custom_call.1} parent=1 // pred_region
      %54 = vsyncadd [#allocation6], 0
      %s56 = sshll.u32 %s2, 4
      %s57 = int_to_ptr.hbm [resolvable:$true] %s56
      %s58 = sshll.u32 [#allocation5], 4
      %s59 = int_to_ptr.vmem [resolvable:$true] %s58
      %61 = dma.hbm_to_vmem [thread:$0]  %s57, 16, %s59, [#allocation6]
    $region13: #{tpu_custom_call.1} parent=1 // pred_fallthru
      _
    // Predicated region
    $region14: #{tpu_custom_call.1} parent=1 // pred_check
      _
    $region15: #{tpu_custom_call.1} parent=1 // pred_check_branch
      %63 = sbr.rel (0) target = $region17
    $region16: #{tpu_custom_call.1} parent=1 // pred_region
      _
    $region17: #{tpu_custom_call.1} parent=1 // pred_fallthru
      _
    // Predicated region
    $region18: #{tpu_custom_call.1} parent=1 // pred_check
      _
    $region19: #{tpu_custom_call.1} parent=1 // pred_check_branch
      %65 = sbr.rel (0) target = $region21
    $region20: #{tpu_custom_call.1} parent=1 // pred_region
      %67 = vsyncadd [#allocation6], 0
      %s69 = sshll.u32 %s4, 4
      %s70 = int_to_ptr.hbm [resolvable:$true] %s69
      %s71 = sshll.u32 [#allocation7], 4
      %s72 = int_to_ptr.vmem [resolvable:$true] %s71
      %74 = dma.hbm_to_vmem [thread:$0]  %s70, 16, %s72, [#allocation6]
    $region21: #{tpu_custom_call.1} parent=1 // pred_fallthru
      _
    // Predicated region
    $region22: #{tpu_custom_call.1} parent=1 // pred_check
      _
    $region23: #{tpu_custom_call.1} parent=1 // pred_check_branch
      %76 = sbr.rel (0) target = $region25
    $region24: #{tpu_custom_call.1} parent=1 // pred_region
      _
    $region25: #{tpu_custom_call.1} parent=1 // pred_fallthru
      _
    // Predicated region
    $region26: #{tpu_custom_call.1} parent=1 // pred_check
      _
    $region27: #{tpu_custom_call.1} parent=1 // pred_check_branch
      %78 = sbr.rel (0) target = $region29
    $region28: #{tpu_custom_call.1} parent=1 // pred_region
      %80 = vsyncadd [#allocation9], 0
      %s82 = sshll.u32 %s6, 4
      %s83 = int_to_ptr.hbm [resolvable:$true] %s82
      %s84 = sshll.u32 [#allocation8], 4
      %s85 = int_to_ptr.vmem [resolvable:$true] %s84
      %87 = dma.hbm_to_vmem [thread:$0]  %s83, 16, %s85, [#allocation9]
    $region29: #{tpu_custom_call.1} parent=1 // pred_fallthru
      _
    // Predicated region
    $region30: #{tpu_custom_call.1} parent=1 // pred_check
      _
    $region31: #{tpu_custom_call.1} parent=1 // pred_check_branch
      %89 = sbr.rel (0) target = $region33
    $region32: #{tpu_custom_call.1} parent=1 // pred_region
      _
    $region33: #{tpu_custom_call.1} parent=1 // pred_fallthru
      _
    // Predicated region
    $region34: #{tpu_custom_call.1} parent=1 // pred_check
      _
    $region35: #{tpu_custom_call.1} parent=1 // pred_check_branch
      %91 = sbr.rel (0) target = $region37
    $region36: #{tpu_custom_call.1} parent=1 // pred_region
      %93 = vsyncadd [#allocation9], 0
      %s95 = sshll.u32 %s8, 4
      %s96 = int_to_ptr.hbm [resolvable:$true] %s95
      %s97 = sshll.u32 [#allocation10], 4
      %s98 = int_to_ptr.vmem [resolvable:$true] %s97
      %100 = dma.hbm_to_vmem [thread:$0]  %s96, 16, %s98, [#allocation9]
    $region37: #{tpu_custom_call.1} parent=1 // pred_fallthru
      _
    // Predicated region
    $region38: #{tpu_custom_call.1} parent=1 // pred_check
      _
    $region39: #{tpu_custom_call.1} parent=1 // pred_check_branch
      %102 = sbr.rel (0) target = $region41
    $region40: #{tpu_custom_call.1} parent=1 // pred_region
      %104 = vsyncadd [#allocation12], 0
      %s106 = sshll.u32 %s9, 4
      %s107 = int_to_ptr.hbm [resolvable:$true] %s106
      %s108 = sshll.u32 [#allocation11], 4
      %s109 = int_to_ptr.vmem [resolvable:$true] %s108
      %111 = dma.hbm_to_vmem [thread:$0]  %s107, 64, %s109, [#allocation12]
    $region41: #{tpu_custom_call.1} parent=1 // pred_fallthru
      _
    // Predicated region
    $region42: #{tpu_custom_call.1} parent=1 // pred_check
      _
    $region43: #{tpu_custom_call.1} parent=1 // pred_check_branch
      %113 = sbr.rel (0) target = $region45
    $region44: #{tpu_custom_call.1} parent=1 // pred_region
      _
    $region45: #{tpu_custom_call.1} parent=1 // pred_fallthru
      _
    // Predicated region
    $region46: #{tpu_custom_call.1} parent=1 // pred_check
      _
    $region47: #{tpu_custom_call.1} parent=1 // pred_check_branch
      %115 = sbr.rel (0) target = $region49
    $region48: #{tpu_custom_call.1} parent=1 // pred_region
      %117 = vsyncadd [#allocation12], 0
      %s118 = sshll.u32 %s11, 4
      %s119 = int_to_ptr.hbm [resolvable:$true] %s118
      %s120 = sshll.u32 [#allocation13], 4
      %s121 = int_to_ptr.vmem [resolvable:$true] %s120
      %126 = dma.hbm_to_vmem [thread:$0]  %s119, 3072, %s121, [#allocation12], 192, 192, 12
    $region49: #{tpu_custom_call.1} parent=1 // pred_fallthru
      _
    // Predicated region
    $region50: #{tpu_custom_call.1} parent=1 // pred_check
      _
    $region51: #{tpu_custom_call.1} parent=1 // pred_check_branch
      %128 = sbr.rel (0) target = $region53
    $region52: #{tpu_custom_call.1} parent=1 // pred_region
      _
    $region53: #{tpu_custom_call.1} parent=1 // pred_fallthru
      _
    // Predicated region
    $region54: #{tpu_custom_call.1} parent=1 // pred_check
      _
    $region55: #{tpu_custom_call.1} parent=1 // pred_check_branch
      %130 = sbr.rel (0) target = $region57
    $region56: #{tpu_custom_call.1} parent=1 // pred_region
      %132 = vsyncadd [#allocation15], 0
      %s133 = sshll.u32 %s13, 4
      %s134 = int_to_ptr.hbm [resolvable:$true] %s133
      %s135 = sshll.u32 [#allocation14], 4
      %s136 = int_to_ptr.vmem [resolvable:$true] %s135
      %141 = dma.hbm_to_vmem [thread:$0]  %s134, 1024, %s136, [#allocation15], 64, 64, 4
    $region57: #{tpu_custom_call.1} parent=1 // pred_fallthru
      _
    // Predicated region
    $region58: #{tpu_custom_call.1} parent=1 // pred_check
      _
    $region59: #{tpu_custom_call.1} parent=1 // pred_check_branch
      %143 = sbr.rel (0) target = $region61
    $region60: #{tpu_custom_call.1} parent=1 // pred_region
      _
    $region61: #{tpu_custom_call.1} parent=1 // pred_fallthru
      _
    // Predicated region
    $region62: #{tpu_custom_call.1} parent=1 // pred_check
      _
    $region63: #{tpu_custom_call.1} parent=1 // pred_check_branch
      %145 = sbr.rel (0) target = $region65
    $region64: #{tpu_custom_call.1} parent=1 // pred_region
      _
    $region65: #{tpu_custom_call.1} parent=1 // pred_fallthru
      _
    // Predicated region
    $region66: #{tpu_custom_call.1} parent=1 // pred_check
      _
    $region67: #{tpu_custom_call.1} parent=1 // pred_check_branch
      %147 = sbr.rel (0) target = $region69
    $region68: #{tpu_custom_call.1} parent=1 // pred_region
      _
    $region69: #{tpu_custom_call.1} parent=1 // pred_fallthru
      _
    // Predicated region
    $region70: #{tpu_custom_call.1} parent=1 // pred_check
      _
    $region71: #{tpu_custom_call.1} parent=1 // pred_check_branch
      %149 = sbr.rel (0) target = $region73
    $region72: #{tpu_custom_call.1} parent=1 // pred_region
      _
    $region73: #{tpu_custom_call.1} parent=1 // pred_fallthru
      _
    // Predicated region
    $region74: #{tpu_custom_call.1} parent=1 // pred_check
      _
    $region75: #{tpu_custom_call.1} parent=1 // pred_check_branch
      %151 = sbr.rel (0) target = $region77
    $region76: #{tpu_custom_call.1} parent=1 // pred_region
      _
    $region77: #{tpu_custom_call.1} parent=1 // pred_fallthru
      _
    // Predicated region
    $region78: #{tpu_custom_call.1} parent=1 // pred_check
      _
    $region79: #{tpu_custom_call.1} parent=1 // pred_check_branch
      %153 = sbr.rel (0) target = $region81
    $region80: #{tpu_custom_call.1} parent=1 // pred_region
      %155 = vsyncadd [#allocation15], 0
      %s156 = sshll.u32 %s19, 4
      %s157 = int_to_ptr.hbm [resolvable:$true] %s156
      %s158 = sshll.u32 [#allocation16], 4
      %s159 = int_to_ptr.vmem [resolvable:$true] %s158
      %164 = dma.hbm_to_vmem [thread:$0]  %s157, 1024, %s159, [#allocation15], 64, 64, 4
    $region81: #{tpu_custom_call.1} parent=1 // pred_fallthru
      _
    // Predicated region
    $region82: #{tpu_custom_call.1} parent=1 // pred_check
      _
    $region83: #{tpu_custom_call.1} parent=1 // pred_check_branch
      %166 = sbr.rel (0) target = $region85
    $region84: #{tpu_custom_call.1} parent=1 // pred_region
      _
    $region85: #{tpu_custom_call.1} parent=1 // pred_fallthru
      _
    // Predicated region
    $region86: #{tpu_custom_call.1} parent=1 // pred_check
      _
    $region87: #{tpu_custom_call.1} parent=1 // pred_check_branch
      %168 = sbr.rel (0) target = $region89
    $region88: #{tpu_custom_call.1} parent=1 // pred_region
      %170 = dma.done [#allocation3], 128
    $region89: #{tpu_custom_call.1} parent=1 // pred_fallthru
      _
    // Predicated region
    $region90: #{tpu_custom_call.1} parent=1 // pred_check
      _
    $region91: #{tpu_custom_call.1} parent=1 // pred_check_branch
      %172 = sbr.rel (0) target = $region93
    $region92: #{tpu_custom_call.1} parent=1 // pred_region
      %174 = dma.done [#allocation6], 16
    $region93: #{tpu_custom_call.1} parent=1 // pred_fallthru
      _
    // Predicated region
    $region94: #{tpu_custom_call.1} parent=1 // pred_check
      _
    $region95: #{tpu_custom_call.1} parent=1 // pred_check_branch
      %176 = sbr.rel (0) target = $region97
    $region96: #{tpu_custom_call.1} parent=1 // pred_region
      %178 = dma.done [#allocation6], 16
    $region97: #{tpu_custom_call.1} parent=1 // pred_fallthru
      _
    // Predicated region
    $region98: #{tpu_custom_call.1} parent=1 // pred_check
      _
    $region99: #{tpu_custom_call.1} parent=1 // pred_check_branch
      %180 = sbr.rel (0) target = $region101
    $region100: #{tpu_custom_call.1} parent=1 // pred_region
      %182 = dma.done [#allocation9], 16
    $region101: #{tpu_custom_call.1} parent=1 // pred_fallthru
      _
    // Predicated region
    $region102: #{tpu_custom_call.1} parent=1 // pred_check
      _
    $region103: #{tpu_custom_call.1} parent=1 // pred_check_branch
      %184 = sbr.rel (0) target = $region105
    $region104: #{tpu_custom_call.1} parent=1 // pred_region
      %186 = dma.done [#allocation9], 16
    $region105: #{tpu_custom_call.1} parent=1 // pred_fallthru
      _
    // Predicated region
    $region106: #{tpu_custom_call.1} parent=1 // pred_check
      _
    $region107: #{tpu_custom_call.1} parent=1 // pred_check_branch
      %188 = sbr.rel (0) target = $region109
    $region108: #{tpu_custom_call.1} parent=1 // pred_region
      %190 = dma.done [#allocation12], 64
    $region109: #{tpu_custom_call.1} parent=1 // pred_fallthru
      _
    // Predicated region
    $region110: #{tpu_custom_call.1} parent=1 // pred_check
      _
    $region111: #{tpu_custom_call.1} parent=1 // pred_check_branch
      %192 = sbr.rel (0) target = $region113
    $region112: #{tpu_custom_call.1} parent=1 // pred_region
      %194 = dma.done [#allocation12], 3072
    $region113: #{tpu_custom_call.1} parent=1 // pred_fallthru
      _
    // Predicated region
    $region114: #{tpu_custom_call.1} parent=1 // pred_check
      _
    $region115: #{tpu_custom_call.1} parent=1 // pred_check_branch
      %196 = sbr.rel (0) target = $region117
    $region116: #{tpu_custom_call.1} parent=1 // pred_region
      %198 = dma.done [#allocation15], 1024
    $region117: #{tpu_custom_call.1} parent=1 // pred_fallthru
      _
    // Predicated region
    $region118: #{tpu_custom_call.1} parent=1 // pred_check
      _
    $region119: #{tpu_custom_call.1} parent=1 // pred_check_branch
      %200 = sbr.rel (0) target = $region121
    $region120: #{tpu_custom_call.1} parent=1 // pred_region
      %202 = dma.done [#allocation15], 1024
    $region121: #{tpu_custom_call.1} parent=1 // pred_fallthru
      _
    %v204 = vld [vmem:[#allocation2] sm:$0xff]
    %v205 = vpack.c.bf16 %v204, %v204
    %v206 = vld [vmem:[%s1] sm:$0xf]
    %v207 = vld [vmem:[%s1 + $0x4] sm:$0xf]
    %v208 = vld [vmem:[%s1 + $0x8] sm:$0xf]
    %v209 = vld [vmem:[%s1 + $0xc] sm:$0xf]
    %v210 = vld [vmem:[%s1 + $0x10] sm:$0xf]
    %v211 = vld [vmem:[%s1 + $0x14] sm:$0xf]
    %v212 = vld [vmem:[%s1 + $0x18] sm:$0xf]
    %v213 = vld [vmem:[%s1 + $0x1c] sm:$0xf]
    %v214 = vld [vmem:[%s1 + $0x20] sm:$0xf]
    %v215 = vld [vmem:[%s1 + $0x24] sm:$0xf]
    %v216 = vld [vmem:[%s1 + $0x28] sm:$0xf]
    %v217 = vld [vmem:[%s1 + $0x2c] sm:$0xf]
    %v218 = vld [vmem:[%s1 + $0x30] sm:$0xf]
    %v219 = vld [vmem:[%s1 + $0x34] sm:$0xf]
    %v220 = vld [vmem:[%s1 + $0x38] sm:$0xf]
    %v221 = vld [vmem:[%s1 + $0x3c] sm:$0xf]
    %v222 = vld [vmem:[#allocation5] sm:$0x1]
    %v224 = vperm.slane %v222, 0
    %v242 = vunpack.c.l.b16 %v206
    %v243 = vunpack.c.l.b16 %v207
    %v244 = vunpack.c.l.b16 %v208
    %v245 = vunpack.c.l.b16 %v209
    %v246 = vunpack.c.l.b16 %v210
    %v247 = vunpack.c.l.b16 %v211
    %v248 = vunpack.c.l.b16 %v212
    %v249 = vunpack.c.l.b16 %v213
    %v250 = vunpack.c.l.b16 %v214
    %v251 = vunpack.c.l.b16 %v215
    %v252 = vunpack.c.l.b16 %v216
    %v253 = vunpack.c.l.b16 %v217
    %v254 = vunpack.c.l.b16 %v218
    %v255 = vunpack.c.l.b16 %v219
    %v256 = vunpack.c.l.b16 %v220
    %v257 = vunpack.c.l.b16 %v221
    %v258 = vpack.c.b16 %v243, %v242
    %v259 = vpack.c.b16 %v245, %v244
    %v260 = vpack.c.b16 %v247, %v246
    %v261 = vpack.c.b16 %v249, %v248
    %v262 = vpack.c.b16 %v251, %v250
    %v263 = vpack.c.b16 %v253, %v252
    %v264 = vpack.c.b16 %v255, %v254
    %v265 = vpack.c.b16 %v257, %v256
    %274 = vmatpush.bf16.msra.mxu0 %v265
    %275 = vmatpush.bf16.msra.mxu0 %v264
    %276 = vmatpush.bf16.msra.mxu0 %v263
    %277 = vmatpush.bf16.msra.mxu0 %v262
    %278 = vmatpush.bf16.msra.mxu0 %v261
    %279 = vmatpush.bf16.msra.mxu0 %v260
    %280 = vmatpush.bf16.msra.mxu0 %v259
    %281 = vmatpush.bf16.msra.mxu0 %v258
    %282 = vmatmul.bf16.gmra.mxu0 %v205
    %v283 = vpop.f32.mrf.mxu0
    %v284 = vadd.f32 %v224, %v283
    %v285 = vpop.f32.mrf.mxu0
    %286 = vdwg.mxu0
    %v287 = vpack.c.bf16 %v284, %v284
    %v288 = vunpack.c.l.bf16 %v287
    %vm289 = vcmp.gt.f32.partialorder %v288, 0.0
    %v290 = vmul.f32 %v288, 0.010009766
    %v291 = vpack.c.bf16 %v290, %v290
    %vm292 = vmpackc.low %vm289, %vm289
    %v293 = vsel %vm292, %v287, %v291
    %v294 = vld [vmem:[%s3] sm:$0xf]
    %v295 = vld [vmem:[%s3 + $0x4] sm:$0xf]
    %v296 = vld [vmem:[%s3 + $0x8] sm:$0xf]
    %v297 = vld [vmem:[%s3 + $0xc] sm:$0xf]
    %v298 = vld [vmem:[%s3 + $0x10] sm:$0xf]
    %v299 = vld [vmem:[%s3 + $0x14] sm:$0xf]
    %v300 = vld [vmem:[%s3 + $0x18] sm:$0xf]
    %v301 = vld [vmem:[%s3 + $0x1c] sm:$0xf]
    %v302 = vld [vmem:[%s3 + $0x20] sm:$0xf]
    %v303 = vld [vmem:[%s3 + $0x24] sm:$0xf]
    %v304 = vld [vmem:[%s3 + $0x28] sm:$0xf]
    %v305 = vld [vmem:[%s3 + $0x2c] sm:$0xf]
    %v306 = vld [vmem:[%s3 + $0x30] sm:$0xf]
    %v307 = vld [vmem:[%s3 + $0x34] sm:$0xf]
    %v308 = vld [vmem:[%s3 + $0x38] sm:$0xf]
    %v309 = vld [vmem:[%s3 + $0x3c] sm:$0xf]
    %v310 = vld [vmem:[#allocation7] sm:$0x1]
    %v312 = vperm.slane %v310, 0
    %v330 = vunpack.c.l.b16 %v294
    %v331 = vunpack.c.l.b16 %v295
    %v332 = vunpack.c.l.b16 %v296
    %v333 = vunpack.c.l.b16 %v297
    %v334 = vunpack.c.l.b16 %v298
    %v335 = vunpack.c.l.b16 %v299
    %v336 = vunpack.c.l.b16 %v300
    %v337 = vunpack.c.l.b16 %v301
    %v338 = vunpack.c.l.b16 %v302
    %v339 = vunpack.c.l.b16 %v303
    %v340 = vunpack.c.l.b16 %v304
    %v341 = vunpack.c.l.b16 %v305
    %v342 = vunpack.c.l.b16 %v306
    %v343 = vunpack.c.l.b16 %v307
    %v344 = vunpack.c.l.b16 %v308
    %v345 = vunpack.c.l.b16 %v309
    %v346 = vpack.c.b16 %v331, %v330
    %v347 = vpack.c.b16 %v333, %v332
    %v348 = vpack.c.b16 %v335, %v334
    %v349 = vpack.c.b16 %v337, %v336
    %v350 = vpack.c.b16 %v339, %v338
    %v351 = vpack.c.b16 %v341, %v340
    %v352 = vpack.c.b16 %v343, %v342
    %v353 = vpack.c.b16 %v345, %v344
    %362 = vmatpush.bf16.msra.mxu0 %v353
    %363 = vmatpush.bf16.msra.mxu0 %v352
    %364 = vmatpush.bf16.msra.mxu0 %v351
    %365 = vmatpush.bf16.msra.mxu0 %v350
    %366 = vmatpush.bf16.msra.mxu0 %v349
    %367 = vmatpush.bf16.msra.mxu0 %v348
    %368 = vmatpush.bf16.msra.mxu0 %v347
    %369 = vmatpush.bf16.msra.mxu0 %v346
    %370 = vmatmul.bf16.gmra.mxu0 %v293
    %v371 = vpop.f32.mrf.mxu0
    %v372 = vadd.f32 %v312, %v371
    %v373 = vpop.f32.mrf.mxu0
    %374 = vdwg.mxu0
    %v375 = vpack.c.bf16 %v372, %v372
    %v376 = vld [vmem:[%s5] sm:$0xf]
    %v377 = vld [vmem:[%s5 + $0x4] sm:$0xf]
    %v378 = vld [vmem:[%s5 + $0x8] sm:$0xf]
    %v379 = vld [vmem:[%s5 + $0xc] sm:$0xf]
    %v380 = vld [vmem:[%s5 + $0x10] sm:$0xf]
    %v381 = vld [vmem:[%s5 + $0x14] sm:$0xf]
    %v382 = vld [vmem:[%s5 + $0x18] sm:$0xf]
    %v383 = vld [vmem:[%s5 + $0x1c] sm:$0xf]
    %v384 = vld [vmem:[%s5 + $0x20] sm:$0xf]
    %v385 = vld [vmem:[%s5 + $0x24] sm:$0xf]
    %v386 = vld [vmem:[%s5 + $0x28] sm:$0xf]
    %v387 = vld [vmem:[%s5 + $0x2c] sm:$0xf]
    %v388 = vld [vmem:[%s5 + $0x30] sm:$0xf]
    %v389 = vld [vmem:[%s5 + $0x34] sm:$0xf]
    %v390 = vld [vmem:[%s5 + $0x38] sm:$0xf]
    %v391 = vld [vmem:[%s5 + $0x3c] sm:$0xf]
    %v392 = vld [vmem:[#allocation8] sm:$0x1]
    %v394 = vperm.slane %v392, 0
    %v412 = vunpack.c.l.b16 %v376
    %v413 = vunpack.c.l.b16 %v377
    %v414 = vunpack.c.l.b16 %v378
    %v415 = vunpack.c.l.b16 %v379
    %v416 = vunpack.c.l.b16 %v380
    %v417 = vunpack.c.l.b16 %v381
    %v418 = vunpack.c.l.b16 %v382
    %v419 = vunpack.c.l.b16 %v383
    %v420 = vunpack.c.l.b16 %v384
    %v421 = vunpack.c.l.b16 %v385
    %v422 = vunpack.c.l.b16 %v386
    %v423 = vunpack.c.l.b16 %v387
    %v424 = vunpack.c.l.b16 %v388
    %v425 = vunpack.c.l.b16 %v389
    %v426 = vunpack.c.l.b16 %v390
    %v427 = vunpack.c.l.b16 %v391
    %v428 = vpack.c.b16 %v413, %v412
    %v429 = vpack.c.b16 %v415, %v414
    %v430 = vpack.c.b16 %v417, %v416
    %v431 = vpack.c.b16 %v419, %v418
    %v432 = vpack.c.b16 %v421, %v420
    %v433 = vpack.c.b16 %v423, %v422
    %v434 = vpack.c.b16 %v425, %v424
    %v435 = vpack.c.b16 %v427, %v426
    %444 = vmatpush.bf16.msra.mxu0 %v435
    %445 = vmatpush.bf16.msra.mxu0 %v434
    %446 = vmatpush.bf16.msra.mxu0 %v433
    %447 = vmatpush.bf16.msra.mxu0 %v432
    %448 = vmatpush.bf16.msra.mxu0 %v431
    %449 = vmatpush.bf16.msra.mxu0 %v430
    %450 = vmatpush.bf16.msra.mxu0 %v429
    %451 = vmatpush.bf16.msra.mxu0 %v428
    %452 = vmatmul.bf16.gmra.mxu0 %v375
    %v453 = vpop.f32.mrf.mxu0
    %v454 = vadd.f32 %v394, %v453
    %v455 = vpop.f32.mrf.mxu0
    %456 = vdwg.mxu0
    %v457 = vpack.c.bf16 %v454, %v454
    %v458 = vunpack.c.l.bf16 %v457
    %vm459 = vcmp.gt.f32.partialorder %v458, 0.0
    %v460 = vmul.f32 %v458, 0.010009766
    %v461 = vpack.c.bf16 %v460, %v460
    %vm462 = vmpackc.low %vm459, %vm459
    %v463 = vsel %vm462, %v457, %v461
    %v464 = vld [vmem:[%s7] sm:$0xf]
    %v465 = vld [vmem:[%s7 + $0x4] sm:$0xf]
    %v466 = vld [vmem:[#allocation10] sm:$0x1]
    %v468 = vperm.slane %v466, 0
    %v472 = vunpack.c.l.b16 %v464
    %v473 = vunpack.c.l.b16 %v465
    %v474 = vpack.c.b16 %v473, %v472
    %vm476 = vcmask 130048
    %v478 = vsel %vm476, %v463, 0
    %480 = vmatpush.bf16.msra.mxu0 0
    %481 = vmatpush.bf16.msra.mxu0 0
    %482 = vmatpush.bf16.msra.mxu0 0
    %483 = vmatpush.bf16.msra.mxu0 0
    %484 = vmatpush.bf16.msra.mxu0 0
    %485 = vmatpush.bf16.msra.mxu0 0
    %486 = vmatpush.bf16.msra.mxu0 0
    %487 = vmatpush.bf16.msra.mxu0 %v474
    %488 = vmatmul.bf16.gmra.mxu0 %v478
    %v489 = vpop.f32.mrf.mxu0
    %v490 = vadd.f32 %v468, %v489
    %v491 = vpop.f32.mrf.mxu0
    %492 = vdwg.mxu0
    %v493 = vpack.c.bf16 %v490, %v490
    %v494 = vunpack.c.l.bf16 %v493
    %vm495 = vcmp.gt.f32.partialorder %v494, 0.0
    %v496 = vmul.f32 %v494, 0.010009766
    %v497 = vpack.c.bf16 %v496, %v496
    %vm498 = vmpackc.low %vm495, %vm495
    %v499 = vsel %vm498, %v493, %v497
    %v500 = vld [vmem:[#allocation11] sm:$0xf]
    %v501 = vld [vmem:[%s10] sm:$0x1]
    %v503 = vperm.slane %v501, 0
    %vm505 = vcmask 64512
    %v507 = vsel %vm505, %v499, 0
    %vm509 = vcmask 1043456
    %v511 = vsel %vm509, %v500, 0
    %513 = vmatpush.bf16.msra.mxu0 0
    %514 = vmatpush.bf16.msra.mxu0 0
    %515 = vmatpush.bf16.msra.mxu0 0
    %516 = vmatpush.bf16.msra.mxu0 0
    %517 = vmatpush.bf16.msra.mxu0 0
    %518 = vmatpush.bf16.msra.mxu0 0
    %519 = vmatpush.bf16.msra.mxu0 0
    %520 = vmatpush.bf16.msra.mxu0 %v511
    %521 = vmatmul.bf16.gmra.mxu0 %v507
    %v522 = vpop.f32.mrf.mxu0
    %v523 = vadd.f32 %v503, %v522
    %v524 = vpop.f32.mrf.mxu0
    %525 = vdwg.mxu0
    %vm526 = vcmp.gt.f32.partialorder %v523, 0.0
    %v527 = vmul.f32 %v523, 0.01
    %v528 = vsel %vm526, %v523, %v527
    %529 = vst [vmem:[#allocation17] sm:$0xff] %v528
    %v530 = vpack.c.bf16 %v528, %v528
    %v531 = vld [vmem:[#allocation13] sm:$0xff]
    %v532 = vld [vmem:[#allocation13 + $0x8] sm:$0xf]
    %v533 = vld [vmem:[#allocation13 + $0xc] sm:$0xff]
    %v534 = vld [vmem:[#allocation13 + $0x14] sm:$0xf]
    %v535 = vld [vmem:[#allocation13 + $0x18] sm:$0xff]
    %v536 = vld [vmem:[#allocation13 + $0x20] sm:$0xf]
    %v537 = vld [vmem:[#allocation13 + $0x24] sm:$0xff]
    %v538 = vld [vmem:[#allocation13 + $0x2c] sm:$0xf]
    %v539 = vld [vmem:[#allocation13 + $0x30] sm:$0xff]
    %v540 = vld [vmem:[#allocation13 + $0x38] sm:$0xf]
    %v541 = vld [vmem:[#allocation13 + $0x3c] sm:$0xff]
    %v542 = vld [vmem:[#allocation13 + $0x44] sm:$0xf]
    %v543 = vld [vmem:[#allocation13 + $0x48] sm:$0xff]
    %v544 = vld [vmem:[#allocation13 + $0x50] sm:$0xf]
    %v545 = vld [vmem:[#allocation13 + $0x54] sm:$0xff]
    %v546 = vld [vmem:[#allocation13 + $0x5c] sm:$0xf]
    %v547 = vld [vmem:[#allocation13 + $0x60] sm:$0xff]
    %v548 = vld [vmem:[#allocation13 + $0x68] sm:$0xf]
    %v549 = vld [vmem:[#allocation13 + $0x6c] sm:$0xff]
    %v550 = vld [vmem:[#allocation13 + $0x74] sm:$0xf]
    %v551 = vld [vmem:[#allocation13 + $0x78] sm:$0xff]
    %v552 = vld [vmem:[#allocation13 + $0x80] sm:$0xf]
    %v553 = vld [vmem:[#allocation13 + $0x84] sm:$0xff]
    %v554 = vld [vmem:[#allocation13 + $0x8c] sm:$0xf]
    %v555 = vld [vmem:[#allocation13 + $0x90] sm:$0xff]
    %v556 = vld [vmem:[#allocation13 + $0x98] sm:$0xf]
    %v557 = vld [vmem:[#allocation13 + $0x9c] sm:$0xff]
    %v558 = vld [vmem:[#allocation13 + $0xa4] sm:$0xf]
    %v559 = vld [vmem:[#allocation13 + $0xa8] sm:$0xff]
    %v560 = vld [vmem:[#allocation13 + $0xb0] sm:$0xf]
    %v561 = vld [vmem:[#allocation13 + $0xb4] sm:$0xff]
    %v562 = vld [vmem:[#allocation13 + $0xbc] sm:$0xf]
    %v563 = vld [vmem:[%s12] sm:$0x7]
    %v565 = vperm.slane %v563, 0
    %v566 = vperm.slane %v563, 1
    %v567 = vperm.slane %v563, 2
    %v603 = vunpack.c.l.b16 %v531
    %v604 = vunpack.c.h.b16 %v531
    %v605 = vunpack.c.l.b16 %v532
    %v606 = vunpack.c.l.b16 %v533
    %v607 = vunpack.c.h.b16 %v533
    %v608 = vunpack.c.l.b16 %v534
    %v609 = vunpack.c.l.b16 %v535
    %v610 = vunpack.c.h.b16 %v535
    %v611 = vunpack.c.l.b16 %v536
    %v612 = vunpack.c.l.b16 %v537
    %v613 = vunpack.c.h.b16 %v537
    %v614 = vunpack.c.l.b16 %v538
    %v615 = vunpack.c.l.b16 %v539
    %v616 = vunpack.c.h.b16 %v539
    %v617 = vunpack.c.l.b16 %v540
    %v618 = vunpack.c.l.b16 %v541
    %v619 = vunpack.c.h.b16 %v541
    %v620 = vunpack.c.l.b16 %v542
    %v621 = vunpack.c.l.b16 %v543
    %v622 = vunpack.c.h.b16 %v543
    %v623 = vunpack.c.l.b16 %v544
    %v624 = vunpack.c.l.b16 %v545
    %v625 = vunpack.c.h.b16 %v545
    %v626 = vunpack.c.l.b16 %v546
    %v627 = vunpack.c.l.b16 %v547
    %v628 = vunpack.c.h.b16 %v547
    %v629 = vunpack.c.l.b16 %v548
    %v630 = vunpack.c.l.b16 %v549
    %v631 = vunpack.c.h.b16 %v549
    %v632 = vunpack.c.l.b16 %v550
    %v633 = vunpack.c.l.b16 %v551
    %v634 = vunpack.c.h.b16 %v551
    %v635 = vunpack.c.l.b16 %v552
    %v636 = vunpack.c.l.b16 %v553
    %v637 = vunpack.c.h.b16 %v553
    %v638 = vunpack.c.l.b16 %v554
    %v639 = vunpack.c.l.b16 %v555
    %v640 = vunpack.c.h.b16 %v555
    %v641 = vunpack.c.l.b16 %v556
    %v642 = vunpack.c.l.b16 %v557
    %v643 = vunpack.c.h.b16 %v557
    %v644 = vunpack.c.l.b16 %v558
    %v645 = vunpack.c.l.b16 %v559
    %v646 = vunpack.c.h.b16 %v559
    %v647 = vunpack.c.l.b16 %v560
    %v648 = vunpack.c.l.b16 %v561
    %v649 = vunpack.c.h.b16 %v561
    %v650 = vunpack.c.l.b16 %v562
    %v651 = vpack.c.b16 %v606, %v603
    %v652 = vpack.c.b16 %v607, %v604
    %v653 = vpack.c.b16 %v608, %v605
    %v654 = vpack.c.b16 %v612, %v609
    %v655 = vpack.c.b16 %v613, %v610
    %v656 = vpack.c.b16 %v614, %v611
    %v657 = vpack.c.b16 %v618, %v615
    %v658 = vpack.c.b16 %v619, %v616
    %v659 = vpack.c.b16 %v620, %v617
    %v660 = vpack.c.b16 %v624, %v621
    %v661 = vpack.c.b16 %v625, %v622
    %v662 = vpack.c.b16 %v626, %v623
    %v663 = vpack.c.b16 %v630, %v627
    %v664 = vpack.c.b16 %v631, %v628
    %v665 = vpack.c.b16 %v632, %v629
    %v666 = vpack.c.b16 %v636, %v633
    %v667 = vpack.c.b16 %v637, %v634
    %v668 = vpack.c.b16 %v638, %v635
    %v669 = vpack.c.b16 %v642, %v639
    %v670 = vpack.c.b16 %v643, %v640
    %v671 = vpack.c.b16 %v644, %v641
    %v672 = vpack.c.b16 %v648, %v645
    %v673 = vpack.c.b16 %v649, %v646
    %v674 = vpack.c.b16 %v650, %v647
    %699 = vmatpush.bf16.msra.mxu0 %v672
    %700 = vmatpush.bf16.msra.mxu0 %v669
    %701 = vmatpush.bf16.msra.mxu0 %v666
    %702 = vmatpush.bf16.msra.mxu0 %v663
    %703 = vmatpush.bf16.msra.mxu0 %v660
    %704 = vmatpush.bf16.msra.mxu0 %v657
    %705 = vmatpush.bf16.msra.mxu0 %v654
    %706 = vmatpush.bf16.msra.mxu0 %v651
    %707 = vmatmul.bf16.gmra.mxu0 %v530
    %v708 = vpop.f32.mrf.mxu0
    %v709 = vadd.f32 %v565, %v708
    %v710 = vpop.f32.mrf.mxu0
    %711 = vdwg.mxu0
    %712 = vmatpush.bf16.msra.mxu0 %v673
    %713 = vmatpush.bf16.msra.mxu0 %v670
    %714 = vmatpush.bf16.msra.mxu0 %v667
    %715 = vmatpush.bf16.msra.mxu0 %v664
    %716 = vmatpush.bf16.msra.mxu0 %v661
    %717 = vmatpush.bf16.msra.mxu0 %v658
    %718 = vmatpush.bf16.msra.mxu0 %v655
    %719 = vmatpush.bf16.msra.mxu0 %v652
    %720 = vmatmul.bf16.gmra.mxu0 %v530
    %v721 = vpop.f32.mrf.mxu0
    %v722 = vadd.f32 %v566, %v721
    %v723 = vpop.f32.mrf.mxu0
    %724 = vdwg.mxu0
    %725 = vmatpush.bf16.msra.mxu0 %v674
    %726 = vmatpush.bf16.msra.mxu0 %v671
    %727 = vmatpush.bf16.msra.mxu0 %v668
    %728 = vmatpush.bf16.msra.mxu0 %v665
    %729 = vmatpush.bf16.msra.mxu0 %v662
    %730 = vmatpush.bf16.msra.mxu0 %v659
    %731 = vmatpush.bf16.msra.mxu0 %v656
    %732 = vmatpush.bf16.msra.mxu0 %v653
    %733 = vmatmul.bf16.gmra.mxu0 %v530
    %v734 = vpop.f32.mrf.mxu0
    %v735 = vadd.f32 %v567, %v734
    %v736 = vpop.f32.mrf.mxu0
    %737 = vdwg.mxu0
    %v738 = vpack.c.bf16 %v722, %v709
    %v739 = vpack.c.bf16 %v735, %v735
    %v740 = vunpack.c.l.bf16 %v738
    %v741 = vunpack.c.h.bf16 %v738
    %v742 = vunpack.c.l.bf16 %v739
    %vm743 = vcmp.gt.f32.partialorder %v740, 0.0
    %vm744 = vcmp.gt.f32.partialorder %v741, 0.0
    %vm745 = vcmp.gt.f32.partialorder %v742, 0.0
    %v746 = vmul.f32 %v740, 0.010009766
    %v747 = vmul.f32 %v741, 0.010009766
    %v748 = vmul.f32 %v742, 0.010009766
    %v749 = vpack.c.bf16 %v747, %v746
    %v750 = vpack.c.bf16 %v748, %v748
    %vm751 = vmpackc.low %vm744, %vm743
    %vm752 = vmpackc.low %vm745, %vm745
    %v753 = vsel %vm751, %v738, %v749
    %v754 = vsel %vm752, %v739, %v750
    %v755 = vld [vmem:[#allocation14] sm:$0xf]
    %v756 = vld [vmem:[#allocation14 + $0x4] sm:$0xf]
    %v757 = vld [vmem:[#allocation14 + $0x8] sm:$0xf]
    %v758 = vld [vmem:[#allocation14 + $0xc] sm:$0xf]
    %v759 = vld [vmem:[#allocation14 + $0x10] sm:$0xf]
    %v760 = vld [vmem:[#allocation14 + $0x14] sm:$0xf]
    %v761 = vld [vmem:[#allocation14 + $0x18] sm:$0xf]
    %v762 = vld [vmem:[#allocation14 + $0x1c] sm:$0xf]
    %v763 = vld [vmem:[#allocation14 + $0x20] sm:$0xf]
    %v764 = vld [vmem:[#allocation14 + $0x24] sm:$0xf]
    %v765 = vld [vmem:[#allocation14 + $0x28] sm:$0xf]
    %v766 = vld [vmem:[#allocation14 + $0x2c] sm:$0xf]
    %v767 = vld [vmem:[#allocation14 + $0x30] sm:$0xf]
    %v768 = vld [vmem:[#allocation14 + $0x34] sm:$0xf]
    %v769 = vld [vmem:[#allocation14 + $0x38] sm:$0xf]
    %v770 = vld [vmem:[#allocation14 + $0x3c] sm:$0xf]
    %v771 = vld [vmem:[%s14] sm:$0x1]
    %v773 = vperm.slane %v771, 0
    %v791 = vunpack.c.l.b16 %v755
    %v792 = vunpack.c.l.b16 %v756
    %v793 = vunpack.c.l.b16 %v757
    %v794 = vunpack.c.l.b16 %v758
    %v795 = vunpack.c.l.b16 %v759
    %v796 = vunpack.c.l.b16 %v760
    %v797 = vunpack.c.l.b16 %v761
    %v798 = vunpack.c.l.b16 %v762
    %v799 = vunpack.c.l.b16 %v763
    %v800 = vunpack.c.l.b16 %v764
    %v801 = vunpack.c.l.b16 %v765
    %v802 = vunpack.c.l.b16 %v766
    %v803 = vunpack.c.l.b16 %v767
    %v804 = vunpack.c.l.b16 %v768
    %v805 = vunpack.c.l.b16 %v769
    %v806 = vunpack.c.l.b16 %v770
    %v807 = vpack.c.b16 %v792, %v791
    %v808 = vpack.c.b16 %v794, %v793
    %v809 = vpack.c.b16 %v796, %v795
    %v810 = vpack.c.b16 %v798, %v797
    %v811 = vpack.c.b16 %v800, %v799
    %v812 = vpack.c.b16 %v802, %v801
    %v813 = vpack.c.b16 %v804, %v803
    %v814 = vpack.c.b16 %v806, %v805
    %823 = vmatpush.bf16.msra.mxu0 %v814
    %824 = vmatpush.bf16.msra.mxu0 %v813
    %825 = vmatpush.bf16.msra.mxu0 %v812
    %826 = vmatpush.bf16.msra.mxu0 %v811
    %827 = vmatpush.bf16.msra.mxu0 %v810
    %828 = vmatpush.bf16.msra.mxu0 %v809
    %829 = vmatpush.bf16.msra.mxu0 %v808
    %830 = vmatpush.bf16.msra.mxu0 %v807
    %831 = vmatmul.bf16.gmra.mxu0 %v753
    %v832 = vpop.f32.mrf.mxu0
    %v833 = vadd.f32 %v773, %v832
    %v834 = vpop.f32.mrf.mxu0
    %835 = vdwg.mxu0
    %836 = vst [vmem:[#allocation18] sm:$0xff] %v833
    %v837 = vld [vmem:[%s15] sm:$0xf]
    %v838 = vld [vmem:[%s15 + $0x4] sm:$0xf]
    %v839 = vld [vmem:[%s15 + $0x8] sm:$0xf]
    %v840 = vld [vmem:[%s15 + $0xc] sm:$0xf]
    %v841 = vld [vmem:[%s15 + $0x10] sm:$0xf]
    %v842 = vld [vmem:[%s15 + $0x14] sm:$0xf]
    %v843 = vld [vmem:[%s15 + $0x18] sm:$0xf]
    %v844 = vld [vmem:[%s15 + $0x1c] sm:$0xf]
    %v845 = vld [vmem:[%s15 + $0x20] sm:$0xf]
    %v846 = vld [vmem:[%s15 + $0x24] sm:$0xf]
    %v847 = vld [vmem:[%s15 + $0x28] sm:$0xf]
    %v848 = vld [vmem:[%s15 + $0x2c] sm:$0xf]
    %v849 = vld [vmem:[%s15 + $0x30] sm:$0xf]
    %v850 = vld [vmem:[%s15 + $0x34] sm:$0xf]
    %v851 = vld [vmem:[%s15 + $0x38] sm:$0xf]
    %v852 = vld [vmem:[%s15 + $0x3c] sm:$0xf]
    %v853 = vld [vmem:[%s16] sm:$0x1]
    %v855 = vperm.slane %v853, 0
    %v858 = vunpack.c.h.b16 %v753
    %v859 = vpack.c.b16 %v858, %v858
    %v877 = vunpack.c.l.b16 %v837
    %v878 = vunpack.c.l.b16 %v838
    %v879 = vunpack.c.l.b16 %v839
    %v880 = vunpack.c.l.b16 %v840
    %v881 = vunpack.c.l.b16 %v841
    %v882 = vunpack.c.l.b16 %v842
    %v883 = vunpack.c.l.b16 %v843
    %v884 = vunpack.c.l.b16 %v844
    %v885 = vunpack.c.l.b16 %v845
    %v886 = vunpack.c.l.b16 %v846
    %v887 = vunpack.c.l.b16 %v847
    %v888 = vunpack.c.l.b16 %v848
    %v889 = vunpack.c.l.b16 %v849
    %v890 = vunpack.c.l.b16 %v850
    %v891 = vunpack.c.l.b16 %v851
    %v892 = vunpack.c.l.b16 %v852
    %v893 = vpack.c.b16 %v878, %v877
    %v894 = vpack.c.b16 %v880, %v879
    %v895 = vpack.c.b16 %v882, %v881
    %v896 = vpack.c.b16 %v884, %v883
    %v897 = vpack.c.b16 %v886, %v885
    %v898 = vpack.c.b16 %v888, %v887
    %v899 = vpack.c.b16 %v890, %v889
    %v900 = vpack.c.b16 %v892, %v891
    %909 = vmatpush.bf16.msra.mxu0 %v900
    %910 = vmatpush.bf16.msra.mxu0 %v899
    %911 = vmatpush.bf16.msra.mxu0 %v898
    %912 = vmatpush.bf16.msra.mxu0 %v897
    %913 = vmatpush.bf16.msra.mxu0 %v896
    %914 = vmatpush.bf16.msra.mxu0 %v895
    %915 = vmatpush.bf16.msra.mxu0 %v894
    %916 = vmatpush.bf16.msra.mxu0 %v893
    %917 = vmatmul.bf16.gmra.mxu0 %v859
    %v918 = vpop.f32.mrf.mxu0
    %v919 = vadd.f32 %v855, %v918
    %v920 = vpop.f32.mrf.mxu0
    %921 = vdwg.mxu0
    %v922 = vpack.c.bf16 %v919, %v919
    %v923 = vunpack.c.l.bf16 %v922
    %vm924 = vcmp.gt.f32.partialorder %v923, 0.0
    %v925 = vmul.f32 %v923, 0.010009766
    %v926 = vpack.c.bf16 %v925, %v925
    %vm927 = vmpackc.low %vm924, %vm924
    %v928 = vsel %vm927, %v922, %v926
    %v929 = vld [vmem:[%s17] sm:$0xf]
    %v930 = vld [vmem:[%s17 + $0x4] sm:$0xf]
    %v931 = vld [vmem:[%s17 + $0x8] sm:$0xf]
    %v932 = vld [vmem:[%s17 + $0xc] sm:$0xf]
    %v933 = vld [vmem:[%s18] sm:$0x1]
    %v935 = vperm.slane %v933, 0
    %v941 = vunpack.c.l.b16 %v929
    %v942 = vunpack.c.l.b16 %v930
    %v943 = vunpack.c.l.b16 %v931
    %v944 = vunpack.c.l.b16 %v932
    %v945 = vpack.c.b16 %v942, %v941
    %v946 = vpack.c.b16 %v944, %v943
    %vm949 = vcmask 261120
    %v951 = vsel %vm949, %v928, 0
    %953 = vmatpush.bf16.msra.mxu0 0
    %954 = vmatpush.bf16.msra.mxu0 0
    %955 = vmatpush.bf16.msra.mxu0 0
    %956 = vmatpush.bf16.msra.mxu0 0
    %957 = vmatpush.bf16.msra.mxu0 0
    %958 = vmatpush.bf16.msra.mxu0 0
    %959 = vmatpush.bf16.msra.mxu0 %v946
    %960 = vmatpush.bf16.msra.mxu0 %v945
    %961 = vmatmul.bf16.gmra.mxu0 %v951
    %v962 = vpop.f32.mrf.mxu0
    %v963 = vadd.f32 %v935, %v962
    %v964 = vpop.f32.mrf.mxu0
    %965 = vdwg.mxu0
    %966 = vst [vmem:[#allocation20] sm:$0xff] %v963
    %v967 = vld [vmem:[#allocation16] sm:$0xf]
    %v968 = vld [vmem:[#allocation16 + $0x4] sm:$0xf]
    %v969 = vld [vmem:[#allocation16 + $0x8] sm:$0xf]
    %v970 = vld [vmem:[#allocation16 + $0xc] sm:$0xf]
    %v971 = vld [vmem:[#allocation16 + $0x10] sm:$0xf]
    %v972 = vld [vmem:[#allocation16 + $0x14] sm:$0xf]
    %v973 = vld [vmem:[#allocation16 + $0x18] sm:$0xf]
    %v974 = vld [vmem:[#allocation16 + $0x1c] sm:$0xf]
    %v975 = vld [vmem:[#allocation16 + $0x20] sm:$0xf]
    %v976 = vld [vmem:[#allocation16 + $0x24] sm:$0xf]
    %v977 = vld [vmem:[#allocation16 + $0x28] sm:$0xf]
    %v978 = vld [vmem:[#allocation16 + $0x2c] sm:$0xf]
    %v979 = vld [vmem:[#allocation16 + $0x30] sm:$0xf]
    %v980 = vld [vmem:[#allocation16 + $0x34] sm:$0xf]
    %v981 = vld [vmem:[#allocation16 + $0x38] sm:$0xf]
    %v982 = vld [vmem:[#allocation16 + $0x3c] sm:$0xf]
    %v983 = vld [vmem:[%s20] sm:$0x1]
    %v985 = vperm.slane %v983, 0
    %v1003 = vunpack.c.l.b16 %v967
    %v1004 = vunpack.c.l.b16 %v968
    %v1005 = vunpack.c.l.b16 %v969
    %v1006 = vunpack.c.l.b16 %v970
    %v1007 = vunpack.c.l.b16 %v971
    %v1008 = vunpack.c.l.b16 %v972
    %v1009 = vunpack.c.l.b16 %v973
    %v1010 = vunpack.c.l.b16 %v974
    %v1011 = vunpack.c.l.b16 %v975
    %v1012 = vunpack.c.l.b16 %v976
    %v1013 = vunpack.c.l.b16 %v977
    %v1014 = vunpack.c.l.b16 %v978
    %v1015 = vunpack.c.l.b16 %v979
    %v1016 = vunpack.c.l.b16 %v980
    %v1017 = vunpack.c.l.b16 %v981
    %v1018 = vunpack.c.l.b16 %v982
    %v1019 = vpack.c.b16 %v1004, %v1003
    %v1020 = vpack.c.b16 %v1006, %v1005
    %v1021 = vpack.c.b16 %v1008, %v1007
    %v1022 = vpack.c.b16 %v1010, %v1009
    %v1023 = vpack.c.b16 %v1012, %v1011
    %v1024 = vpack.c.b16 %v1014, %v1013
    %v1025 = vpack.c.b16 %v1016, %v1015
    %v1026 = vpack.c.b16 %v1018, %v1017
    %1035 = vmatpush.bf16.msra.mxu0 %v1026
    %1036 = vmatpush.bf16.msra.mxu0 %v1025
    %1037 = vmatpush.bf16.msra.mxu0 %v1024
    %1038 = vmatpush.bf16.msra.mxu0 %v1023
    %1039 = vmatpush.bf16.msra.mxu0 %v1022
    %1040 = vmatpush.bf16.msra.mxu0 %v1021
    %1041 = vmatpush.bf16.msra.mxu0 %v1020
    %1042 = vmatpush.bf16.msra.mxu0 %v1019
    %1043 = vmatmul.bf16.gmra.mxu0 %v754
    %v1044 = vpop.f32.mrf.mxu0
    %v1045 = vadd.f32 %v985, %v1044
    %v1046 = vpop.f32.mrf.mxu0
    %1047 = vdwg.mxu0
    %v1048 = vmax.f32 %v1045, 0.0
    %1049 = vst [vmem:[#allocation21] sm:$0xff] %v1048
    // Predicated region
    $region122: #{tpu_custom_call.1} parent=1 // pred_check
      _
    $region123: #{tpu_custom_call.1} parent=1 // pred_check_branch
      %1051 = sbr.rel (0) target = $region125
    $region124: #{tpu_custom_call.1} parent=1 // pred_region
      %1053 = vsyncadd [#allocation4], 0
      %s1055 = sshll.u32 [#allocation17], 4
      %s1056 = int_to_ptr.vmem [resolvable:$true] %s1055
      %s1057 = sshll.u32 %s21, 4
      %s1058 = int_to_ptr.hbm [resolvable:$true] %s1057
      %1060 = dma.vmem_to_hbm [thread:$0]  %s1056, 128, %s1058, [#allocation4]
    $region125: #{tpu_custom_call.1} parent=1 // pred_fallthru
      _
    // Predicated region
    $region126: #{tpu_custom_call.1} parent=1 // pred_check
      _
    $region127: #{tpu_custom_call.1} parent=1 // pred_check_branch
      %1062 = sbr.rel (0) target = $region129
    $region128: #{tpu_custom_call.1} parent=1 // pred_region
      %1064 = vsyncadd [#allocation19], 0
      %s1066 = sshll.u32 [#allocation18], 4
      %s1067 = int_to_ptr.vmem [resolvable:$true] %s1066
      %s1068 = sshll.u32 %s22, 4
      %s1069 = int_to_ptr.hbm [resolvable:$true] %s1068
      %1071 = dma.vmem_to_hbm [thread:$0]  %s1067, 128, %s1069, [#allocation19]
    $region129: #{tpu_custom_call.1} parent=1 // pred_fallthru
      _
    // Predicated region
    $region130: #{tpu_custom_call.1} parent=1 // pred_check
      _
    $region131: #{tpu_custom_call.1} parent=1 // pred_check_branch
      %1073 = sbr.rel (0) target = $region133
    $region132: #{tpu_custom_call.1} parent=1 // pred_region
      %1075 = vsyncadd [#allocation19], 0
      %s1077 = sshll.u32 [#allocation20], 4
      %s1078 = int_to_ptr.vmem [resolvable:$true] %s1077
      %s1079 = sshll.u32 %s23, 4
      %s1080 = int_to_ptr.hbm [resolvable:$true] %s1079
      %1082 = dma.vmem_to_hbm [thread:$0]  %s1078, 128, %s1080, [#allocation19]
    $region133: #{tpu_custom_call.1} parent=1 // pred_fallthru
      _
    // Predicated region
    $region134: #{tpu_custom_call.1} parent=1 // pred_check
      _
    $region135: #{tpu_custom_call.1} parent=1 // pred_check_branch
      %1084 = sbr.rel (0) target = $region137
    $region136: #{tpu_custom_call.1} parent=1 // pred_region
      %1086 = vsyncadd [#allocation22], 0
      %s1088 = sshll.u32 [#allocation21], 4
      %s1089 = int_to_ptr.vmem [resolvable:$true] %s1088
      %s1090 = sshll.u32 %s24, 4
      %s1091 = int_to_ptr.hbm [resolvable:$true] %s1090
      %1093 = dma.vmem_to_hbm [thread:$0]  %s1089, 128, %s1091, [#allocation22]
    $region137: #{tpu_custom_call.1} parent=1 // pred_fallthru
      _
    // Predicated region
    $region138: #{tpu_custom_call.1} parent=1 // pred_check
      _
    $region139: #{tpu_custom_call.1} parent=1 // pred_check_branch
      %1095 = sbr.rel (0) target = $region141
    $region140: #{tpu_custom_call.1} parent=1 // pred_region
      %1097 = dma.done [#allocation4], 128
    $region141: #{tpu_custom_call.1} parent=1 // pred_fallthru
      _
    // Predicated region
    $region142: #{tpu_custom_call.1} parent=1 // pred_check
      _
    $region143: #{tpu_custom_call.1} parent=1 // pred_check_branch
      %1099 = sbr.rel (0) target = $region145
    $region144: #{tpu_custom_call.1} parent=1 // pred_region
      %1101 = dma.done [#allocation19], 128
    $region145: #{tpu_custom_call.1} parent=1 // pred_fallthru
      _
    // Predicated region
    $region146: #{tpu_custom_call.1} parent=1 // pred_check
      _
    $region147: #{tpu_custom_call.1} parent=1 // pred_check_branch
      %1103 = sbr.rel (0) target = $region149
    $region148: #{tpu_custom_call.1} parent=1 // pred_region
      %1105 = dma.done [#allocation19], 128
    $region149: #{tpu_custom_call.1} parent=1 // pred_fallthru
      _
    // Predicated region
    $region150: #{tpu_custom_call.1} parent=1 // pred_check
      _
    $region151: #{tpu_custom_call.1} parent=1 // pred_check_branch
      %1107 = sbr.rel (0) target = $region153
    $region152: #{tpu_custom_call.1} parent=1 // pred_region
      %1109 = dma.done [#allocation22], 128
    $region153: #{tpu_custom_call.1} parent=1 // pred_fallthru
      _
    %1110 = vsyncpa [#allocation3], 1
    %1111 = vsyncpa [#allocation6], 1
    %1112 = vsyncpa [#allocation9], 1
    %1113 = vsyncpa [#allocation12], 1
    %1114 = vsyncpa [#allocation15], 1
    %1115 = vsyncpa [#allocation4], 1
    %1116 = vsyncpa [#allocation19], 1
    %1117 = vsyncpa [#allocation22], 1

</llo_original>
